<compile_context>
chip_gen: v7x
topology: tpu7x:2x2x1
jax: 0.10.0
libtpu: 0.0.40
codegen_flags: <defaults>
</compile_context>

<pallas_src>
import numpy as np
import jax
import jax.numpy as jnp
from jax.experimental import pallas as pl
from jax.experimental.pallas import tpu as pltpu

N = 10            # size of the quadratic task (theta has 10 entries)
_LANE = 128       # TPU vreg lane width; tasks are packed along lanes
# Tasks per grid step.  VMEM cost is ~0.6 KB/task (x2 for double buffering), so
# 2048 tasks/step stays well under v5e's 16 MiB scoped default and v7x's 64 MiB.
_TASKS_PER_STEP_CAP = 2048


def _round_up(x, m):
    return (x + m - 1) // m * m


def _rep_seg_matrices(n):
    """Constant 0/1 matrices for the blocked batched mat-vec.

    rep (n*n, n): rep[k, j] = 1 iff j == k % n   (replicates theta along k=i*n+j)
    seg (n, n*n): seg[i, k] = 1 iff i == k // n  (segment-sums k back to rows i)
    """
    k = np.arange(n * n)
    rep = (k[:, None] % n == np.arange(n)[None, :]).astype(np.float32)
    seg = (np.arange(n)[:, None] == (k[None, :] // n)).astype(np.float32)
    return jnp.asarray(rep), jnp.asarray(seg)


def _quad_loss_kernel(w_ref, th_ref, y_ref, rep_ref, seg_ref, o_ref):
    """One grid step = TB tasks, task index along the lane axis.

    w_ref:   (n*n, TB)  w[k=i*n+j, b] = W[b, i, j]
    th_ref:  (n,   TB)  theta[j, b]
    y_ref:   (n,   TB)  y[i, b]
    rep_ref: (n*n, n)   constant replicate matrix
    seg_ref: (n,  n*n)  constant segment-sum matrix
    o_ref:   (1,   TB)  lane-packed losses
    """
    hi = jax.lax.Precision.HIGHEST
    # theta replicated along k: th_rep[k, b] = theta[k % n, b]
    th_rep = jnp.dot(rep_ref[...], th_ref[...],
                     preferred_element_type=jnp.float32, precision=hi)   # (n*n, TB)
    prod = w_ref[...] * th_rep                                           # VPU, dense tiles
    # Segment-sum over j within each row i: wx[i, b] = sum_j W[b,i,j] * theta[b,j]
    wx = jnp.dot(seg_ref[...], prod,
                 preferred_element_type=jnp.float32, precision=hi)       # (n, TB)
    r = wx - y_ref[...]                                                  # (n, TB)
    # Sublane (XLU) reduction -> one loss per lane; store is full-lane, unmasked.
    o_ref[...] = jnp.sum(r * r, axis=0, keepdims=True)                   # (1, TB)


@jax.jit
def quad_losses(W, theta, y):
    """Batched quadratic losses: loss[b] = sum((W[b] @ theta[b] - y[b]) ** 2).

    W: (B, n, n) float32, theta: (B, n) float32, y: (B, n) float32 -> (B,) float32.
    One pallas_call; tasks are packed along lanes, TB tasks per grid step.
    """
    B, n, _ = W.shape
    W = W.astype(jnp.float32)
    theta = theta.astype(jnp.float32)
    y = y.astype(jnp.float32)

    # Choose tasks-per-step and padded batch (static at trace time).
    if B <= _TASKS_PER_STEP_CAP:
        tb = _round_up(B, _LANE)          # single grid step
        b_pad = tb
    else:
        tb = _TASKS_PER_STEP_CAP          # multiple of 128
        b_pad = _round_up(B, tb)
    grid_steps = b_pad // tb

    # Kernel-facing lane-major layouts (layout plumbing only; fused under jit).
    wT = W.reshape(B, n * n).T            # (n*n, B)
    thT = theta.T                          # (n, B)
    yT = y.T                               # (n, B)
    pad = b_pad - B
    if pad:
        wT = jnp.pad(wT, ((0, 0), (0, pad)))
        thT = jnp.pad(thT, ((0, 0), (0, pad)))
        yT = jnp.pad(yT, ((0, 0), (0, pad)))

    rep, seg = _rep_seg_matrices(n)

    out = pl.pallas_call(
        _quad_loss_kernel,
        out_shape=jax.ShapeDtypeStruct((1, b_pad), jnp.float32),
        grid=(grid_steps,),
        in_specs=[
            pl.BlockSpec((n * n, tb), lambda g: (0, g)),
            pl.BlockSpec((n, tb), lambda g: (0, g)),
            pl.BlockSpec((n, tb), lambda g: (0, g)),
            pl.BlockSpec((n * n, n), lambda g: (0, 0)),   # constants, resident
            pl.BlockSpec((n, n * n), lambda g: (0, 0)),
        ],
        out_specs=pl.BlockSpec((1, tb), lambda g: (0, g)),
        compiler_params=pltpu.CompilerParams(
            dimension_semantics=("parallel",)),
    )(wT, thT, yT, rep, seg)
    return out[0, :B]


@jax.jit
def quad_loss_single(W, y, theta):
    """Single-task loss = sum((W @ theta - y) ** 2), via the batched kernel (B=1)."""
    return quad_losses(W[jnp.newaxis], theta[jnp.newaxis], y[jnp.newaxis])[0]


class QuadraticTarget:
    """JAX analogue of the L2L quadratic target: get_loss(theta) = sum((W@theta - y)^2)."""

    def __init__(self, key, n=N):
        kw, ky = jax.random.split(key)
        self.n = n
        self.W = jax.random.normal(kw, (n, n), dtype=jnp.float32)
        self.y = jax.random.normal(ky, (n,), dtype=jnp.float32)

    def get_loss(self, theta):
        theta = jnp.asarray(theta, jnp.float32)
        return quad_loss_single(self.W, self.y, theta)


class QuadOptimizeeNormal:
    """forward(target) -> target.get_loss(self.theta).

    theta is read at forward time (no cached kernel-layout copy), so updates to
    self.theta during an L2L inner loop are always reflected in the loss."""

    def __init__(self, theta=None):
        if theta is None:
            theta = jnp.zeros((N,), dtype=jnp.float32)   # nn.Parameter(torch.zeros(10))
        self.theta = theta

    def forward(self, target):
        return target.get_loss(self.theta)

    def all_named_parameters(self):
        return [("theta", self.theta)]


if __name__ == "__main__":
    key = jax.random.PRNGKey(0)
    k_target, k_theta, k_batch = jax.random.split(key, 3)
    hi = jax.lax.Precision.HIGHEST

    # ---- single-task module forward (B=1 through the batched kernel) ----
    target = QuadraticTarget(k_target, n=N)

    model_zero = QuadOptimizeeNormal()                 # theta = zeros(10), as in __init__
    loss_zero = jax.block_until_ready(model_zero.forward(target))

    theta = jax.random.normal(k_theta, (N,), dtype=jnp.float32)
    model = QuadOptimizeeNormal(theta=theta)
    loss = jax.block_until_ready(model.forward(target))

    ref_zero = jnp.sum(
        (jnp.einsum("ij,j->i", target.W, model_zero.theta, precision=hi) - target.y) ** 2)
    ref = jnp.sum(
        (jnp.einsum("ij,j->i", target.W, theta, precision=hi) - target.y) ** 2)
    assert jnp.allclose(loss_zero, ref_zero, rtol=1e-4, atol=1e-4)
    assert jnp.allclose(loss, ref, rtol=1e-4, atol=1e-4)

    # ---- batched: B quadratic tasks evaluated in ONE pallas_call ----
    B = 8
    kw, ky, kt = jax.random.split(k_batch, 3)
    W_b = jax.random.normal(kw, (B, N, N), dtype=jnp.float32)
    y_b = jax.random.normal(ky, (B, N), dtype=jnp.float32)
    th_b = jax.random.normal(kt, (B, N), dtype=jnp.float32)

    losses = jax.block_until_ready(quad_losses(W_b, th_b, y_b))
    ref_b = jnp.sum(
        (jnp.einsum("bij,bj->bi", W_b, th_b, precision=hi) - y_b) ** 2, axis=-1)
    assert losses.shape == (B,)
    assert jnp.allclose(losses, ref_b, rtol=1e-4, atol=1e-4)

    print("KERNEL_OK")
</pallas_src>

<mosaic_0001>
module attributes {stable_mosaic.version = 11 : i64} {
  func.func @_quad_loss_kernel(%arg0: i32, %arg1: memref<100x128xf32, #tpu.memory_space<vmem>>, %arg2: memref<10x128xf32, #tpu.memory_space<vmem>>, %arg3: memref<10x128xf32, #tpu.memory_space<vmem>>, %arg4: memref<100x10xf32, #tpu.memory_space<vmem>>, %arg5: memref<10x100xf32, #tpu.memory_space<vmem>>, %arg6: memref<1x128xf32, #tpu.memory_space<vmem>>) attributes {dimension_semantics = [#tpu.dimension_semantics<parallel>], iteration_bounds = array<i64: 1>, scalar_prefetch = 0 : i64, scratch_operands = 0 : i64, tpu.core_type = #tpu.core_type<tc>, window_params = [{transform_indices = @transform_0, window_bounds = array<i64: 100, 128>}, {transform_indices = @transform_1, window_bounds = array<i64: 10, 128>}, {transform_indices = @transform_2, window_bounds = array<i64: 10, 128>}, {pipeline_mode = #tpu.pipeline_mode<synchronous>, transform_indices = @transform_3, window_bounds = array<i64: 100, 10>}, {pipeline_mode = #tpu.pipeline_mode<synchronous>, transform_indices = @transform_4, window_bounds = array<i64: 10, 100>}, {transform_indices = @transform_5, window_bounds = array<i64: 1, 128>}]} {
    %c0 = arith.constant 0 : index
    %c0_0 = arith.constant 0 : index
    %0 = vector.load %arg4[%c0, %c0_0] : memref<100x10xf32, #tpu.memory_space<vmem>>, vector<100x10xf32>
    %c0_1 = arith.constant 0 : index
    %c0_2 = arith.constant 0 : index
    %1 = vector.load %arg2[%c0_1, %c0_2] : memref<10x128xf32, #tpu.memory_space<vmem>>, vector<10x128xf32>
    %cst = arith.constant dense<0.000000e+00> : vector<100x128xf32>
    %2 = tpu.matmul %0, %1, %cst {dimension_numbers = #tpu.dot_dimension_numbers<[1], [0], [0], [1], [0, 0, 1, 1], [], []>, precision = #tpu.contract_precision<fp32>} : vector<100x10xf32>, vector<10x128xf32>, vector<100x128xf32> -> vector<100x128xf32>
    %c0_3 = arith.constant 0 : index
    %c0_4 = arith.constant 0 : index
    %3 = vector.load %arg1[%c0_3, %c0_4] : memref<100x128xf32, #tpu.memory_space<vmem>>, vector<100x128xf32>
    %4 = arith.mulf %3, %2 : vector<100x128xf32>
    %c0_5 = arith.constant 0 : index
    %c0_6 = arith.constant 0 : index
    %5 = vector.load %arg5[%c0_5, %c0_6] : memref<10x100xf32, #tpu.memory_space<vmem>>, vector<10x100xf32>
    %cst_7 = arith.constant dense<0.000000e+00> : vector<10x128xf32>
    %6 = tpu.matmul %5, %4, %cst_7 {dimension_numbers = #tpu.dot_dimension_numbers<[1], [0], [0], [1], [0, 0, 1, 1], [], []>, precision = #tpu.contract_precision<fp32>} : vector<10x100xf32>, vector<100x128xf32>, vector<10x128xf32> -> vector<10x128xf32>
    %c0_8 = arith.constant 0 : index
    %c0_9 = arith.constant 0 : index
    %7 = vector.load %arg3[%c0_8, %c0_9] : memref<10x128xf32, #tpu.memory_space<vmem>>, vector<10x128xf32>
    %8 = arith.subf %6, %7 : vector<10x128xf32>
    %9 = arith.mulf %8, %8 : vector<10x128xf32>
    %cst_10 = arith.constant dense<0.000000e+00> : vector<128xf32>
    %10 = vector.multi_reduction <add>, %9, %cst_10 [0] : vector<10x128xf32> to vector<128xf32>
    %11 = vector.shape_cast %10 : vector<128xf32> to vector<1x128xf32>
    %c0_11 = arith.constant 0 : index
    %c0_12 = arith.constant 0 : index
    %12 = vector.load %arg6[%c0_11, %c0_12] : memref<1x128xf32, #tpu.memory_space<vmem>>, vector<1x128xf32>
    tpu.vector_store %arg6[%c0_11, %c0_12], %11 {strides = array<i32>} : memref<1x128xf32, #tpu.memory_space<vmem>>, vector<1x128xf32>,
    return
  }
  func.func @transform_0(%arg0: i32) -> (i32, i32) {
    %c0_i32 = arith.constant 0 : i32
    %c0_i32_0 = arith.constant 0 : i32
    return %c0_i32, %arg0 : i32, i32
  }
  func.func @transform_1(%arg0: i32) -> (i32, i32) {
    %c0_i32 = arith.constant 0 : i32
    %c0_i32_0 = arith.constant 0 : i32
    return %c0_i32, %arg0 : i32, i32
  }
  func.func @transform_2(%arg0: i32) -> (i32, i32) {
    %c0_i32 = arith.constant 0 : i32
    %c0_i32_0 = arith.constant 0 : i32
    return %c0_i32, %arg0 : i32, i32
  }
  func.func @transform_3(%arg0: i32) -> (i32, i32) {
    %c0_i32 = arith.constant 0 : i32
    %c0_i32_0 = arith.constant 0 : i32
    %c0_i32_1 = arith.constant 0 : i32
    return %c0_i32, %c0_i32_0 : i32, i32
  }
  func.func @transform_4(%arg0: i32) -> (i32, i32) {
    %c0_i32 = arith.constant 0 : i32
    %c0_i32_0 = arith.constant 0 : i32
    %c0_i32_1 = arith.constant 0 : i32
    return %c0_i32, %c0_i32_0 : i32, i32
  }
  func.func @transform_5(%arg0: i32) -> (i32, i32) {
    %c0_i32 = arith.constant 0 : i32
    %c0_i32_0 = arith.constant 0 : i32
    return %c0_i32, %arg0 : i32, i32
  }
}

</mosaic_0001>

<llo_original>
// kernel: quad_losses.1
$region0: #{quad_losses.1}
  #allocation0 [shape = 'u32[]', space=smem, size = 0x4, offset = 0x4, fixed_abs, tag = 'smem constant byte address 0x4 - core index']
  #allocation1 [shape = 'u32[144,128]{1,0:T(1,128)}', space=vmem, size = 0x12000, scoped, tag = 'internal scratch']
  %s0 = inlined_call_operand.vmem [shape: f32[100,128], index: 0, kind: input, shape index: {}]
  %s1 = inlined_call_operand.vmem [shape: f32[10,128], index: 1, kind: input, shape index: {}]
  %s2 = inlined_call_operand.vmem [shape: f32[10,128], index: 2, kind: input, shape index: {}]
  %s3 = inlined_call_operand.vmem [shape: f32[100,10], index: 3, kind: input, shape index: {}]
  %s4 = inlined_call_operand.vmem [shape: f32[10,100], index: 4, kind: input, shape index: {}]
  %s5 = inlined_call_operand.hbm [shape: f32[1,128], index: 5, kind: output, shape index: {}]
  %s6 = sld [smem:[#allocation0]]
  $region30: #{quad_losses.1} parent=0
    _
  %s8 = ssub.s32 1, %s6
  %s9 = scalar_select 0, %s8, %s6
  $region1: #{quad_losses.1} parent=0
    #allocation2 [shape = 'u8[512]{0}', space=vmem, size = 0x400, scoped, tag = 'output window, operand 0, single buffered']
    #allocation3 [shape = 's32[1]{0}', space=sflag, size = 0x4, scoped, tag = 'scoped memory for quad_losses.1']
    %10 = vsyncpa [#allocation3], 0
    // Predicated region
    $region2: #{quad_losses.1} parent=1 // pred_check
      _
    $region3: #{quad_losses.1} parent=1 // pred_check_branch
      %12 = sbr.rel (0) target = $region5
    $region4: #{quad_losses.1} parent=1 // pred_region
      _
    $region5: #{quad_losses.1} parent=1 // pred_fallthru
      _
    // Predicated region
    $region6: #{quad_losses.1} parent=1 // pred_check
      _
    $region7: #{quad_losses.1} parent=1 // pred_check_branch
      %14 = sbr.rel (0) target = $region9
    $region8: #{quad_losses.1} parent=1 // pred_region
      _
    $region9: #{quad_losses.1} parent=1 // pred_fallthru
      _
    // Predicated region
    $region10: #{quad_losses.1} parent=1 // pred_check
      _
    $region11: #{quad_losses.1} parent=1 // pred_check_branch
      %16 = sbr.rel (0) target = $region13
    $region12: #{quad_losses.1} parent=1 // pred_region
      _
    $region13: #{quad_losses.1} parent=1 // pred_fallthru
      _
    // Predicated region
    $region14: #{quad_losses.1} parent=1 // pred_check
      _
    $region15: #{quad_losses.1} parent=1 // pred_check_branch
      %18 = sbr.rel (0) target = $region17
    $region16: #{quad_losses.1} parent=1 // pred_region
      _
    $region17: #{quad_losses.1} parent=1 // pred_fallthru
      _
    // Predicated region
    $region18: #{quad_losses.1} parent=1 // pred_check
      _
    $region19: #{quad_losses.1} parent=1 // pred_check_branch
      %20 = sbr.rel (0) target = $region21
    $region20: #{quad_losses.1} parent=1 // pred_region
      _
    $region21: #{quad_losses.1} parent=1 // pred_fallthru
      _
    %v21 = vld [vmem:[%s3] sm:$0xff]
    %v22 = vld [vmem:[%s3 + $0x8] sm:$0xff]
    %v23 = vld [vmem:[%s3 + $0x10] sm:$0xff]
    %v24 = vld [vmem:[%s3 + $0x18] sm:$0xff]
    %v25 = vld [vmem:[%s3 + $0x20] sm:$0xff]
    %v26 = vld [vmem:[%s3 + $0x28] sm:$0xff]
    %v27 = vld [vmem:[%s3 + $0x30] sm:$0xff]
    %v28 = vld [vmem:[%s3 + $0x38] sm:$0xff]
    %v29 = vld [vmem:[%s3 + $0x40] sm:$0xff]
    %v30 = vld [vmem:[%s3 + $0x48] sm:$0xff]
    %v31 = vld [vmem:[%s3 + $0x50] sm:$0xff]
    %v32 = vld [vmem:[%s3 + $0x58] sm:$0xff]
    %v33 = vld [vmem:[%s3 + $0x60] sm:$0xf]
    %v34 = vld [vmem:[%s1] sm:$0xff]
    %v35 = vld [vmem:[%s1 + $0x8] sm:$0x3]
    %vm36 = vcmask 80896
    %v38 = vsel %vm36, %v21, 0
    %v41 = vsel %vm36, %v22, 0
    %v44 = vsel %vm36, %v23, 0
    %v47 = vsel %vm36, %v24, 0
    %v50 = vsel %vm36, %v25, 0
    %v53 = vsel %vm36, %v26, 0
    %v56 = vsel %vm36, %v27, 0
    %v59 = vsel %vm36, %v28, 0
    %v62 = vsel %vm36, %v29, 0
    %v65 = vsel %vm36, %v30, 0
    %v68 = vsel %vm36, %v31, 0
    %v71 = vsel %vm36, %v32, 0
    %v74 = vsel %vm36, %v33, 0
    %vm76 = vcmask 1041408
    %v78 = vsel %vm76, %v35, 0
    %80 = vmatprep.subr.mxu0 0.0
    %v81 = vand.u32 %v34, 4294901760
    %82 = vmatpush1.msra.mxu0 %v81
    %83 = vmatprep.subr.mxu0 0.0
    %v84 = vand.u32 %v78, 4294901760
    %85 = vmatpush1.msra.mxu0 %v84
    %86 = vmatprep.subr.mxu0 0.0
    %87 = vmatpush1.msra.mxu0 0.0
    %88 = vmatprep.subr.mxu0 0.0
    %89 = vmatpush1.msra.mxu0 0.0
    %90 = vmatprep.subr.mxu0 0.0
    %91 = vmatpush1.msra.mxu0 0.0
    %92 = vmatprep.subr.mxu0 0.0
    %93 = vmatpush1.msra.mxu0 0.0
    %94 = vmatprep.subr.mxu0 0.0
    %95 = vmatpush1.msra.mxu0 0.0
    %96 = vmatprep.subr.mxu0 0.0
    %97 = vmatpush1.msra.mxu0 0.0
    %98 = vmatprep.subr.mxu0 0.0
    %99 = vmatpush1.msra.mxu0 0.0
    %100 = vmatprep.subr.mxu0 0.0
    %101 = vmatpush1.msra.mxu0 0.0
    %102 = vmatprep.subr.mxu0 0.0
    %103 = vmatpush1.msra.mxu0 0.0
    %104 = vmatprep.subr.mxu0 0.0
    %105 = vmatpush1.msra.mxu0 0.0
    %106 = vmatprep.subr.mxu0 0.0
    %107 = vmatpush1.msra.mxu0 0.0
    %108 = vmatprep.subr.mxu0 0.0
    %109 = vmatpush1.msra.mxu0 0.0
    %110 = vmatprep.subr.mxu0 0.0
    %111 = vmatpush1.msra.mxu0 0.0
    %112 = vmatprep.subr.mxu0 0.0
    %113 = vmatpush1.msra.mxu0 0.0
    %114 = vmatprep.subr.mxu0 0.0
    %115 = vmatpush1.msra.mxu0 0.0
    %116 = vmatprep.subr.mxu0 0.0
    %117 = vmatpush1.msra.mxu0 0.0
    %118 = vmatprep.subr.mxu0 0.0
    %119 = vmatpush1.msra.mxu0 0.0
    %120 = vmatprep.subr.mxu0 0.0
    %121 = vmatpush1.msra.mxu0 0.0
    %122 = vmatprep.subr.mxu0 0.0
    %123 = vmatpush1.msra.mxu0 0.0
    %124 = vmatprep.subr.mxu0 0.0
    %125 = vmatpush1.msra.mxu0 0.0
    %126 = vmatprep.subr.mxu0 0.0
    %127 = vmatpush1.msra.mxu0 0.0
    %128 = vmatprep.subr.mxu0 0.0
    %129 = vmatpush1.msra.mxu0 0.0
    %130 = vmatprep.subr.mxu0 0.0
    %131 = vmatpush1.msra.mxu0 0.0
    %132 = vmatprep.subr.mxu0 0.0
    %133 = vmatpush1.msra.mxu0 0.0
    %134 = vmatprep.subr.mxu0 0.0
    %135 = vmatpush1.msra.mxu0 0.0
    %136 = vmatprep.subr.mxu0 0.0
    %137 = vmatpush1.msra.mxu0 0.0
    %138 = vmatprep.subr.mxu0 0.0
    %139 = vmatpush1.msra.mxu0 0.0
    %140 = vmatprep.subr.mxu0 0.0
    %141 = vmatpush1.msra.mxu0 0.0
    %142 = vmatprep.subr.mxu0 0.0
    %143 = vmatpush1.msra.mxu0 0.0
    %144 = vmatprep.subr.mxu0 0.0
    %145 = vmatpush1.msra.mxu0 0.0
    %146 = vmatprep.mubr.f32.mxu0 0.0
    %v147 = vand.u32 %v38, 4294901760
    %v148 = vsub.f32 %v38, %v147
    %v149 = vand.u32 %v148, 4294901760
    %v150 = vsub.f32 %v148, %v149
    %v151 = vand.u32 %v150, 4294901760
    %152 = vmatmul.mubr.f32.gmra.mrb[0].mxu0 %v151
    %v153 = vpop.f32.mrb[0].mxu0
    %v154 = vadd.f32 0.0, %v153
    %v155 = vpop.f32.mrb[0].mxu0
    %156 = vmatprep.mubr.f32.mxu0 0.0
    %v157 = vand.u32 %v41, 4294901760
    %v158 = vsub.f32 %v41, %v157
    %v159 = vand.u32 %v158, 4294901760
    %v160 = vsub.f32 %v158, %v159
    %v161 = vand.u32 %v160, 4294901760
    %162 = vmatmul.mubr.f32.gmra.mrb[0].mxu0 %v161
    %v163 = vpop.f32.mrb[0].mxu0
    %v164 = vadd.f32 0.0, %v163
    %v165 = vpop.f32.mrb[0].mxu0
    %166 = vmatprep.mubr.f32.mxu0 0.0
    %v167 = vand.u32 %v44, 4294901760
    %v168 = vsub.f32 %v44, %v167
    %v169 = vand.u32 %v168, 4294901760
    %v170 = vsub.f32 %v168, %v169
    %v171 = vand.u32 %v170, 4294901760
    %172 = vmatmul.mubr.f32.gmra.mrb[0].mxu0 %v171
    %v173 = vpop.f32.mrb[0].mxu0
    %v174 = vadd.f32 0.0, %v173
    %v175 = vpop.f32.mrb[0].mxu0
    %176 = vmatprep.mubr.f32.mxu0 0.0
    %v177 = vand.u32 %v47, 4294901760
    %v178 = vsub.f32 %v47, %v177
    %v179 = vand.u32 %v178, 4294901760
    %v180 = vsub.f32 %v178, %v179
    %v181 = vand.u32 %v180, 4294901760
    %182 = vmatmul.mubr.f32.gmra.mrb[0].mxu0 %v181
    %v183 = vpop.f32.mrb[0].mxu0
    %v184 = vadd.f32 0.0, %v183
    %v185 = vpop.f32.mrb[0].mxu0
    %186 = vmatprep.mubr.f32.mxu0 0.0
    %v187 = vand.u32 %v50, 4294901760
    %v188 = vsub.f32 %v50, %v187
    %v189 = vand.u32 %v188, 4294901760
    %v190 = vsub.f32 %v188, %v189
    %v191 = vand.u32 %v190, 4294901760
    %192 = vmatmul.mubr.f32.gmra.mrb[0].mxu0 %v191
    %v193 = vpop.f32.mrb[0].mxu0
    %v194 = vadd.f32 0.0, %v193
    %v195 = vpop.f32.mrb[0].mxu0
    %196 = vmatprep.mubr.f32.mxu0 0.0
    %v197 = vand.u32 %v53, 4294901760
    %v198 = vsub.f32 %v53, %v197
    %v199 = vand.u32 %v198, 4294901760
    %v200 = vsub.f32 %v198, %v199
    %v201 = vand.u32 %v200, 4294901760
    %202 = vmatmul.mubr.f32.gmra.mrb[0].mxu0 %v201
    %v203 = vpop.f32.mrb[0].mxu0
    %v204 = vadd.f32 0.0, %v203
    %v205 = vpop.f32.mrb[0].mxu0
    %206 = vmatprep.mubr.f32.mxu0 0.0
    %v207 = vand.u32 %v56, 4294901760
    %v208 = vsub.f32 %v56, %v207
    %v209 = vand.u32 %v208, 4294901760
    %v210 = vsub.f32 %v208, %v209
    %v211 = vand.u32 %v210, 4294901760
    %212 = vmatmul.mubr.f32.gmra.mrb[0].mxu0 %v211
    %v213 = vpop.f32.mrb[0].mxu0
    %v214 = vadd.f32 0.0, %v213
    %v215 = vpop.f32.mrb[0].mxu0
    %216 = vmatprep.mubr.f32.mxu0 0.0
    %v217 = vand.u32 %v59, 4294901760
    %v218 = vsub.f32 %v59, %v217
    %v219 = vand.u32 %v218, 4294901760
    %v220 = vsub.f32 %v218, %v219
    %v221 = vand.u32 %v220, 4294901760
    %222 = vmatmul.mubr.f32.gmra.mrb[0].mxu0 %v221
    %v223 = vpop.f32.mrb[0].mxu0
    %v224 = vadd.f32 0.0, %v223
    %v225 = vpop.f32.mrb[0].mxu0
    %226 = vmatprep.mubr.f32.mxu0 0.0
    %v227 = vand.u32 %v62, 4294901760
    %v228 = vsub.f32 %v62, %v227
    %v229 = vand.u32 %v228, 4294901760
    %v230 = vsub.f32 %v228, %v229
    %v231 = vand.u32 %v230, 4294901760
    %232 = vmatmul.mubr.f32.gmra.mrb[0].mxu0 %v231
    %v233 = vpop.f32.mrb[0].mxu0
    %v234 = vadd.f32 0.0, %v233
    %v235 = vpop.f32.mrb[0].mxu0
    %236 = vmatprep.mubr.f32.mxu0 0.0
    %v237 = vand.u32 %v65, 4294901760
    %v238 = vsub.f32 %v65, %v237
    %v239 = vand.u32 %v238, 4294901760
    %v240 = vsub.f32 %v238, %v239
    %v241 = vand.u32 %v240, 4294901760
    %242 = vmatmul.mubr.f32.gmra.mrb[0].mxu0 %v241
    %v243 = vpop.f32.mrb[0].mxu0
    %v244 = vadd.f32 0.0, %v243
    %v245 = vpop.f32.mrb[0].mxu0
    %246 = vmatprep.mubr.f32.mxu0 0.0
    %v247 = vand.u32 %v68, 4294901760
    %v248 = vsub.f32 %v68, %v247
    %v249 = vand.u32 %v248, 4294901760
    %v250 = vsub.f32 %v248, %v249
    %v251 = vand.u32 %v250, 4294901760
    %252 = vmatmul.mubr.f32.gmra.mrb[0].mxu0 %v251
    %v253 = vpop.f32.mrb[0].mxu0
    %v254 = vadd.f32 0.0, %v253
    %v255 = vpop.f32.mrb[0].mxu0
    %256 = vmatprep.mubr.f32.mxu0 0.0
    %v257 = vand.u32 %v71, 4294901760
    %v258 = vsub.f32 %v71, %v257
    %v259 = vand.u32 %v258, 4294901760
    %v260 = vsub.f32 %v258, %v259
    %v261 = vand.u32 %v260, 4294901760
    %262 = vmatmul.mubr.f32.gmra.mrb[0].mxu0 %v261
    %v263 = vpop.f32.mrb[0].mxu0
    %v264 = vadd.f32 0.0, %v263
    %v265 = vpop.f32.mrb[0].mxu0
    %266 = vmatprep.mubr.f32.mxu0 0.0
    %v267 = vand.u32 %v74, 4294901760
    %v268 = vsub.f32 %v74, %v267
    %v269 = vand.u32 %v268, 4294901760
    %v270 = vsub.f32 %v268, %v269
    %v271 = vand.u32 %v270, 4294901760
    %272 = vmatmul.mubr.f32.gmra.mrb[0].mxu0 %v271
    %v273 = vpop.f32.mrb[0].mxu0
    %v274 = vadd.f32 0.0, %v273
    %v275 = vpop.f32.mrb[0].mxu0
    %276 = vdwg.mxu0
    %277 = vmatprep.subr.mxu0 0.0
    %v278 = vand.u32 %v34, 4294901760
    %v279 = vsub.f32 %v34, %v278
    %v280 = vand.u32 %v279, 4294901760
    %v281 = vsub.f32 %v279, %v280
    %v282 = vand.u32 %v281, 4294901760
    %283 = vmatpush1.msra.mxu0 %v282
    %284 = vmatprep.subr.mxu0 0.0
    %v285 = vand.u32 %v78, 4294901760
    %v286 = vsub.f32 %v78, %v285
    %v287 = vand.u32 %v286, 4294901760
    %v288 = vsub.f32 %v286, %v287
    %v289 = vand.u32 %v288, 4294901760
    %290 = vmatpush1.msra.mxu0 %v289
    %291 = vmatprep.subr.mxu0 0.0
    %292 = vmatpush1.msra.mxu0 0.0
    %293 = vmatprep.subr.mxu0 0.0
    %294 = vmatpush1.msra.mxu0 0.0
    %295 = vmatprep.subr.mxu0 0.0
    %296 = vmatpush1.msra.mxu0 0.0
    %297 = vmatprep.subr.mxu0 0.0
    %298 = vmatpush1.msra.mxu0 0.0
    %299 = vmatprep.subr.mxu0 0.0
    %300 = vmatpush1.msra.mxu0 0.0
    %301 = vmatprep.subr.mxu0 0.0
    %302 = vmatpush1.msra.mxu0 0.0
    %303 = vmatprep.subr.mxu0 0.0
    %304 = vmatpush1.msra.mxu0 0.0
    %305 = vmatprep.subr.mxu0 0.0
    %306 = vmatpush1.msra.mxu0 0.0
    %307 = vmatprep.subr.mxu0 0.0
    %308 = vmatpush1.msra.mxu0 0.0
    %309 = vmatprep.subr.mxu0 0.0
    %310 = vmatpush1.msra.mxu0 0.0
    %311 = vmatprep.subr.mxu0 0.0
    %312 = vmatpush1.msra.mxu0 0.0
    %313 = vmatprep.subr.mxu0 0.0
    %314 = vmatpush1.msra.mxu0 0.0
    %315 = vmatprep.subr.mxu0 0.0
    %316 = vmatpush1.msra.mxu0 0.0
    %317 = vmatprep.subr.mxu0 0.0
    %318 = vmatpush1.msra.mxu0 0.0
    %319 = vmatprep.subr.mxu0 0.0
    %320 = vmatpush1.msra.mxu0 0.0
    %321 = vmatprep.subr.mxu0 0.0
    %322 = vmatpush1.msra.mxu0 0.0
    %323 = vmatprep.subr.mxu0 0.0
    %324 = vmatpush1.msra.mxu0 0.0
    %325 = vmatprep.subr.mxu0 0.0
    %326 = vmatpush1.msra.mxu0 0.0
    %327 = vmatprep.subr.mxu0 0.0
    %328 = vmatpush1.msra.mxu0 0.0
    %329 = vmatprep.subr.mxu0 0.0
    %330 = vmatpush1.msra.mxu0 0.0
    %331 = vmatprep.subr.mxu0 0.0
    %332 = vmatpush1.msra.mxu0 0.0
    %333 = vmatprep.subr.mxu0 0.0
    %334 = vmatpush1.msra.mxu0 0.0
    %335 = vmatprep.subr.mxu0 0.0
    %336 = vmatpush1.msra.mxu0 0.0
    %337 = vmatprep.subr.mxu0 0.0
    %338 = vmatpush1.msra.mxu0 0.0
    %339 = vmatprep.subr.mxu0 0.0
    %340 = vmatpush1.msra.mxu0 0.0
    %341 = vmatprep.subr.mxu0 0.0
    %342 = vmatpush1.msra.mxu0 0.0
    %343 = vmatprep.subr.mxu0 0.0
    %344 = vmatpush1.msra.mxu0 0.0
    %345 = vmatprep.subr.mxu0 0.0
    %346 = vmatpush1.msra.mxu0 0.0
    %347 = vmatprep.subr.mxu0 0.0
    %348 = vmatpush1.msra.mxu0 0.0
    %349 = vmatprep.subr.mxu0 0.0
    %350 = vmatpush1.msra.mxu0 0.0
    %351 = vmatprep.mubr.f32.mxu0 0.0
    %v352 = vand.u32 %v38, 4294901760
    %353 = vmatmul.mubr.f32.gmra.mrb[0].mxu0 %v352
    %v354 = vpop.f32.mrb[0].mxu0
    %v355 = vadd.f32 %v154, %v354
    %v356 = vpop.f32.mrb[0].mxu0
    %357 = vmatprep.mubr.f32.mxu0 0.0
    %v358 = vand.u32 %v41, 4294901760
    %359 = vmatmul.mubr.f32.gmra.mrb[0].mxu0 %v358
    %v360 = vpop.f32.mrb[0].mxu0
    %v361 = vadd.f32 %v164, %v360
    %v362 = vpop.f32.mrb[0].mxu0
    %363 = vmatprep.mubr.f32.mxu0 0.0
    %v364 = vand.u32 %v44, 4294901760
    %365 = vmatmul.mubr.f32.gmra.mrb[0].mxu0 %v364
    %v366 = vpop.f32.mrb[0].mxu0
    %v367 = vadd.f32 %v174, %v366
    %v368 = vpop.f32.mrb[0].mxu0
    %369 = vmatprep.mubr.f32.mxu0 0.0
    %v370 = vand.u32 %v47, 4294901760
    %371 = vmatmul.mubr.f32.gmra.mrb[0].mxu0 %v370
    %v372 = vpop.f32.mrb[0].mxu0
    %v373 = vadd.f32 %v184, %v372
    %v374 = vpop.f32.mrb[0].mxu0
    %375 = vmatprep.mubr.f32.mxu0 0.0
    %v376 = vand.u32 %v50, 4294901760
    %377 = vmatmul.mubr.f32.gmra.mrb[0].mxu0 %v376
    %v378 = vpop.f32.mrb[0].mxu0
    %v379 = vadd.f32 %v194, %v378
    %v380 = vpop.f32.mrb[0].mxu0
    %381 = vmatprep.mubr.f32.mxu0 0.0
    %v382 = vand.u32 %v53, 4294901760
    %383 = vmatmul.mubr.f32.gmra.mrb[0].mxu0 %v382
    %v384 = vpop.f32.mrb[0].mxu0
    %v385 = vadd.f32 %v204, %v384
    %v386 = vpop.f32.mrb[0].mxu0
    %387 = vmatprep.mubr.f32.mxu0 0.0
    %v388 = vand.u32 %v56, 4294901760
    %389 = vmatmul.mubr.f32.gmra.mrb[0].mxu0 %v388
    %v390 = vpop.f32.mrb[0].mxu0
    %v391 = vadd.f32 %v214, %v390
    %v392 = vpop.f32.mrb[0].mxu0
    %393 = vmatprep.mubr.f32.mxu0 0.0
    %v394 = vand.u32 %v59, 4294901760
    %395 = vmatmul.mubr.f32.gmra.mrb[0].mxu0 %v394
    %v396 = vpop.f32.mrb[0].mxu0
    %v397 = vadd.f32 %v224, %v396
    %v398 = vpop.f32.mrb[0].mxu0
    %399 = vmatprep.mubr.f32.mxu0 0.0
    %v400 = vand.u32 %v62, 4294901760
    %401 = vmatmul.mubr.f32.gmra.mrb[0].mxu0 %v400
    %v402 = vpop.f32.mrb[0].mxu0
    %v403 = vadd.f32 %v234, %v402
    %v404 = vpop.f32.mrb[0].mxu0
    %405 = vmatprep.mubr.f32.mxu0 0.0
    %v406 = vand.u32 %v65, 4294901760
    %407 = vmatmul.mubr.f32.gmra.mrb[0].mxu0 %v406
    %v408 = vpop.f32.mrb[0].mxu0
    %v409 = vadd.f32 %v244, %v408
    %v410 = vpop.f32.mrb[0].mxu0
    %411 = vmatprep.mubr.f32.mxu0 0.0
    %v412 = vand.u32 %v68, 4294901760
    %413 = vmatmul.mubr.f32.gmra.mrb[0].mxu0 %v412
    %v414 = vpop.f32.mrb[0].mxu0
    %v415 = vadd.f32 %v254, %v414
    %v416 = vpop.f32.mrb[0].mxu0
    %417 = vmatprep.mubr.f32.mxu0 0.0
    %v418 = vand.u32 %v71, 4294901760
    %419 = vmatmul.mubr.f32.gmra.mrb[0].mxu0 %v418
    %v420 = vpop.f32.mrb[0].mxu0
    %v421 = vadd.f32 %v264, %v420
    %v422 = vpop.f32.mrb[0].mxu0
    %423 = vmatprep.mubr.f32.mxu0 0.0
    %v424 = vand.u32 %v74, 4294901760
    %425 = vmatmul.mubr.f32.gmra.mrb[0].mxu0 %v424
    %v426 = vpop.f32.mrb[0].mxu0
    %v427 = vadd.f32 %v274, %v426
    %v428 = vpop.f32.mrb[0].mxu0
    %429 = vdwg.mxu0
    %430 = vmatprep.subr.mxu0 0.0
    %v431 = vand.u32 %v34, 4294901760
    %v432 = vsub.f32 %v34, %v431
    %433 = vmatpush1.msra.mxu0 %v432
    %434 = vmatprep.subr.mxu0 0.0
    %v435 = vand.u32 %v78, 4294901760
    %v436 = vsub.f32 %v78, %v435
    %437 = vmatpush1.msra.mxu0 %v436
    %438 = vmatprep.subr.mxu0 0.0
    %439 = vmatpush1.msra.mxu0 0.0
    %440 = vmatprep.subr.mxu0 0.0
    %441 = vmatpush1.msra.mxu0 0.0
    %442 = vmatprep.subr.mxu0 0.0
    %443 = vmatpush1.msra.mxu0 0.0
    %444 = vmatprep.subr.mxu0 0.0
    %445 = vmatpush1.msra.mxu0 0.0
    %446 = vmatprep.subr.mxu0 0.0
    %447 = vmatpush1.msra.mxu0 0.0
    %448 = vmatprep.subr.mxu0 0.0
    %449 = vmatpush1.msra.mxu0 0.0
    %450 = vmatprep.subr.mxu0 0.0
    %451 = vmatpush1.msra.mxu0 0.0
    %452 = vmatprep.subr.mxu0 0.0
    %453 = vmatpush1.msra.mxu0 0.0
    %454 = vmatprep.subr.mxu0 0.0
    %455 = vmatpush1.msra.mxu0 0.0
    %456 = vmatprep.subr.mxu0 0.0
    %457 = vmatpush1.msra.mxu0 0.0
    %458 = vmatprep.subr.mxu0 0.0
    %459 = vmatpush1.msra.mxu0 0.0
    %460 = vmatprep.subr.mxu0 0.0
    %461 = vmatpush1.msra.mxu0 0.0
    %462 = vmatprep.subr.mxu0 0.0
    %463 = vmatpush1.msra.mxu0 0.0
    %464 = vmatprep.subr.mxu0 0.0
    %465 = vmatpush1.msra.mxu0 0.0
    %466 = vmatprep.subr.mxu0 0.0
    %467 = vmatpush1.msra.mxu0 0.0
    %468 = vmatprep.subr.mxu0 0.0
    %469 = vmatpush1.msra.mxu0 0.0
    %470 = vmatprep.subr.mxu0 0.0
    %471 = vmatpush1.msra.mxu0 0.0
    %472 = vmatprep.subr.mxu0 0.0
    %473 = vmatpush1.msra.mxu0 0.0
    %474 = vmatprep.subr.mxu0 0.0
    %475 = vmatpush1.msra.mxu0 0.0
    %476 = vmatprep.subr.mxu0 0.0
    %477 = vmatpush1.msra.mxu0 0.0
    %478 = vmatprep.subr.mxu0 0.0
    %479 = vmatpush1.msra.mxu0 0.0
    %480 = vmatprep.subr.mxu0 0.0
    %481 = vmatpush1.msra.mxu0 0.0
    %482 = vmatprep.subr.mxu0 0.0
    %483 = vmatpush1.msra.mxu0 0.0
    %484 = vmatprep.subr.mxu0 0.0
    %485 = vmatpush1.msra.mxu0 0.0
    %486 = vmatprep.subr.mxu0 0.0
    %487 = vmatpush1.msra.mxu0 0.0
    %488 = vmatprep.subr.mxu0 0.0
    %489 = vmatpush1.msra.mxu0 0.0
    %490 = vmatprep.subr.mxu0 0.0
    %491 = vmatpush1.msra.mxu0 0.0
    %492 = vmatprep.subr.mxu0 0.0
    %493 = vmatpush1.msra.mxu0 0.0
    %494 = vmatprep.subr.mxu0 0.0
    %495 = vmatpush1.msra.mxu0 0.0
    %496 = vmatprep.subr.mxu0 0.0
    %497 = vmatpush1.msra.mxu0 0.0
    %498 = vmatprep.mubr.f32.mxu0 0.0
    %v499 = vand.u32 %v38, 4294901760
    %v500 = vsub.f32 %v38, %v499
    %501 = vmatmul.mubr.f32.gmra.mrb[0].mxu0 %v500
    %v502 = vpop.f32.mrb[0].mxu0
    %v503 = vadd.f32 %v355, %v502
    %v504 = vpop.f32.mrb[0].mxu0
    %505 = vmatprep.mubr.f32.mxu0 0.0
    %v506 = vand.u32 %v41, 4294901760
    %v507 = vsub.f32 %v41, %v506
    %508 = vmatmul.mubr.f32.gmra.mrb[0].mxu0 %v507
    %v509 = vpop.f32.mrb[0].mxu0
    %v510 = vadd.f32 %v361, %v509
    %v511 = vpop.f32.mrb[0].mxu0
    %512 = vmatprep.mubr.f32.mxu0 0.0
    %v513 = vand.u32 %v44, 4294901760
    %v514 = vsub.f32 %v44, %v513
    %515 = vmatmul.mubr.f32.gmra.mrb[0].mxu0 %v514
    %v516 = vpop.f32.mrb[0].mxu0
    %v517 = vadd.f32 %v367, %v516
    %v518 = vpop.f32.mrb[0].mxu0
    %519 = vmatprep.mubr.f32.mxu0 0.0
    %v520 = vand.u32 %v47, 4294901760
    %v521 = vsub.f32 %v47, %v520
    %522 = vmatmul.mubr.f32.gmra.mrb[0].mxu0 %v521
    %v523 = vpop.f32.mrb[0].mxu0
    %v524 = vadd.f32 %v373, %v523
    %v525 = vpop.f32.mrb[0].mxu0
    %526 = vmatprep.mubr.f32.mxu0 0.0
    %v527 = vand.u32 %v50, 4294901760
    %v528 = vsub.f32 %v50, %v527
    %529 = vmatmul.mubr.f32.gmra.mrb[0].mxu0 %v528
    %v530 = vpop.f32.mrb[0].mxu0
    %v531 = vadd.f32 %v379, %v530
    %v532 = vpop.f32.mrb[0].mxu0
    %533 = vmatprep.mubr.f32.mxu0 0.0
    %v534 = vand.u32 %v53, 4294901760
    %v535 = vsub.f32 %v53, %v534
    %536 = vmatmul.mubr.f32.gmra.mrb[0].mxu0 %v535
    %v537 = vpop.f32.mrb[0].mxu0
    %v538 = vadd.f32 %v385, %v537
    %v539 = vpop.f32.mrb[0].mxu0
    %540 = vmatprep.mubr.f32.mxu0 0.0
    %v541 = vand.u32 %v56, 4294901760
    %v542 = vsub.f32 %v56, %v541
    %543 = vmatmul.mubr.f32.gmra.mrb[0].mxu0 %v542
    %v544 = vpop.f32.mrb[0].mxu0
    %v545 = vadd.f32 %v391, %v544
    %v546 = vpop.f32.mrb[0].mxu0
    %547 = vmatprep.mubr.f32.mxu0 0.0
    %v548 = vand.u32 %v59, 4294901760
    %v549 = vsub.f32 %v59, %v548
    %550 = vmatmul.mubr.f32.gmra.mrb[0].mxu0 %v549
    %v551 = vpop.f32.mrb[0].mxu0
    %v552 = vadd.f32 %v397, %v551
    %v553 = vpop.f32.mrb[0].mxu0
    %554 = vmatprep.mubr.f32.mxu0 0.0
    %v555 = vand.u32 %v62, 4294901760
    %v556 = vsub.f32 %v62, %v555
    %557 = vmatmul.mubr.f32.gmra.mrb[0].mxu0 %v556
    %v558 = vpop.f32.mrb[0].mxu0
    %v559 = vadd.f32 %v403, %v558
    %v560 = vpop.f32.mrb[0].mxu0
    %561 = vmatprep.mubr.f32.mxu0 0.0
    %v562 = vand.u32 %v65, 4294901760
    %v563 = vsub.f32 %v65, %v562
    %564 = vmatmul.mubr.f32.gmra.mrb[0].mxu0 %v563
    %v565 = vpop.f32.mrb[0].mxu0
    %v566 = vadd.f32 %v409, %v565
    %v567 = vpop.f32.mrb[0].mxu0
    %568 = vmatprep.mubr.f32.mxu0 0.0
    %v569 = vand.u32 %v68, 4294901760
    %v570 = vsub.f32 %v68, %v569
    %571 = vmatmul.mubr.f32.gmra.mrb[0].mxu0 %v570
    %v572 = vpop.f32.mrb[0].mxu0
    %v573 = vadd.f32 %v415, %v572
    %v574 = vpop.f32.mrb[0].mxu0
    %575 = vmatprep.mubr.f32.mxu0 0.0
    %v576 = vand.u32 %v71, 4294901760
    %v577 = vsub.f32 %v71, %v576
    %578 = vmatmul.mubr.f32.gmra.mrb[0].mxu0 %v577
    %v579 = vpop.f32.mrb[0].mxu0
    %v580 = vadd.f32 %v421, %v579
    %v581 = vpop.f32.mrb[0].mxu0
    %582 = vmatprep.mubr.f32.mxu0 0.0
    %v583 = vand.u32 %v74, 4294901760
    %v584 = vsub.f32 %v74, %v583
    %585 = vmatmul.mubr.f32.gmra.mrb[0].mxu0 %v584
    %v586 = vpop.f32.mrb[0].mxu0
    %v587 = vadd.f32 %v427, %v586
    %v588 = vpop.f32.mrb[0].mxu0
    %589 = vdwg.mxu0
    %590 = vmatprep.subr.mxu0 0.0
    %v591 = vand.u32 %v34, 4294901760
    %592 = vmatpush1.msra.mxu0 %v591
    %593 = vmatprep.subr.mxu0 0.0
    %v594 = vand.u32 %v78, 4294901760
    %595 = vmatpush1.msra.mxu0 %v594
    %596 = vmatprep.subr.mxu0 0.0
    %597 = vmatpush1.msra.mxu0 0.0
    %598 = vmatprep.subr.mxu0 0.0
    %599 = vmatpush1.msra.mxu0 0.0
    %600 = vmatprep.subr.mxu0 0.0
    %601 = vmatpush1.msra.mxu0 0.0
    %602 = vmatprep.subr.mxu0 0.0
    %603 = vmatpush1.msra.mxu0 0.0
    %604 = vmatprep.subr.mxu0 0.0
    %605 = vmatpush1.msra.mxu0 0.0
    %606 = vmatprep.subr.mxu0 0.0
    %607 = vmatpush1.msra.mxu0 0.0
    %608 = vmatprep.subr.mxu0 0.0
    %609 = vmatpush1.msra.mxu0 0.0
    %610 = vmatprep.subr.mxu0 0.0
    %611 = vmatpush1.msra.mxu0 0.0
    %612 = vmatprep.subr.mxu0 0.0
    %613 = vmatpush1.msra.mxu0 0.0
    %614 = vmatprep.subr.mxu0 0.0
    %615 = vmatpush1.msra.mxu0 0.0
    %616 = vmatprep.subr.mxu0 0.0
    %617 = vmatpush1.msra.mxu0 0.0
    %618 = vmatprep.subr.mxu0 0.0
    %619 = vmatpush1.msra.mxu0 0.0
    %620 = vmatprep.subr.mxu0 0.0
    %621 = vmatpush1.msra.mxu0 0.0
    %622 = vmatprep.subr.mxu0 0.0
    %623 = vmatpush1.msra.mxu0 0.0
    %624 = vmatprep.subr.mxu0 0.0
    %625 = vmatpush1.msra.mxu0 0.0
    %626 = vmatprep.subr.mxu0 0.0
    %627 = vmatpush1.msra.mxu0 0.0
    %628 = vmatprep.subr.mxu0 0.0
    %629 = vmatpush1.msra.mxu0 0.0
    %630 = vmatprep.subr.mxu0 0.0
    %631 = vmatpush1.msra.mxu0 0.0
    %632 = vmatprep.subr.mxu0 0.0
    %633 = vmatpush1.msra.mxu0 0.0
    %634 = vmatprep.subr.mxu0 0.0
    %635 = vmatpush1.msra.mxu0 0.0
    %636 = vmatprep.subr.mxu0 0.0
    %637 = vmatpush1.msra.mxu0 0.0
    %638 = vmatprep.subr.mxu0 0.0
    %639 = vmatpush1.msra.mxu0 0.0
    %640 = vmatprep.subr.mxu0 0.0
    %641 = vmatpush1.msra.mxu0 0.0
    %642 = vmatprep.subr.mxu0 0.0
    %643 = vmatpush1.msra.mxu0 0.0
    %644 = vmatprep.subr.mxu0 0.0
    %645 = vmatpush1.msra.mxu0 0.0
    %646 = vmatprep.subr.mxu0 0.0
    %647 = vmatpush1.msra.mxu0 0.0
    %648 = vmatprep.subr.mxu0 0.0
    %649 = vmatpush1.msra.mxu0 0.0
    %650 = vmatprep.subr.mxu0 0.0
    %651 = vmatpush1.msra.mxu0 0.0
    %652 = vmatprep.subr.mxu0 0.0
    %653 = vmatpush1.msra.mxu0 0.0
    %654 = vmatprep.subr.mxu0 0.0
    %655 = vmatpush1.msra.mxu0 0.0
    %656 = vmatprep.mubr.f32.mxu0 0.0
    %v657 = vand.u32 %v38, 4294901760
    %v658 = vsub.f32 %v38, %v657
    %v659 = vand.u32 %v658, 4294901760
    %660 = vmatmul.mubr.f32.gmra.mrb[0].mxu0 %v659
    %v661 = vpop.f32.mrb[0].mxu0
    %v662 = vadd.f32 %v503, %v661
    %v663 = vpop.f32.mrb[0].mxu0
    %664 = vmatprep.mubr.f32.mxu0 0.0
    %v665 = vand.u32 %v41, 4294901760
    %v666 = vsub.f32 %v41, %v665
    %v667 = vand.u32 %v666, 4294901760
    %668 = vmatmul.mubr.f32.gmra.mrb[0].mxu0 %v667
    %v669 = vpop.f32.mrb[0].mxu0
    %v670 = vadd.f32 %v510, %v669
    %v671 = vpop.f32.mrb[0].mxu0
    %672 = vmatprep.mubr.f32.mxu0 0.0
    %v673 = vand.u32 %v44, 4294901760
    %v674 = vsub.f32 %v44, %v673
    %v675 = vand.u32 %v674, 4294901760
    %676 = vmatmul.mubr.f32.gmra.mrb[0].mxu0 %v675
    %v677 = vpop.f32.mrb[0].mxu0
    %v678 = vadd.f32 %v517, %v677
    %v679 = vpop.f32.mrb[0].mxu0
    %680 = vmatprep.mubr.f32.mxu0 0.0
    %v681 = vand.u32 %v47, 4294901760
    %v682 = vsub.f32 %v47, %v681
    %v683 = vand.u32 %v682, 4294901760
    %684 = vmatmul.mubr.f32.gmra.mrb[0].mxu0 %v683
    %v685 = vpop.f32.mrb[0].mxu0
    %v686 = vadd.f32 %v524, %v685
    %v687 = vpop.f32.mrb[0].mxu0
    %688 = vmatprep.mubr.f32.mxu0 0.0
    %v689 = vand.u32 %v50, 4294901760
    %v690 = vsub.f32 %v50, %v689
    %v691 = vand.u32 %v690, 4294901760
    %692 = vmatmul.mubr.f32.gmra.mrb[0].mxu0 %v691
    %v693 = vpop.f32.mrb[0].mxu0
    %v694 = vadd.f32 %v531, %v693
    %v695 = vpop.f32.mrb[0].mxu0
    %696 = vmatprep.mubr.f32.mxu0 0.0
    %v697 = vand.u32 %v53, 4294901760
    %v698 = vsub.f32 %v53, %v697
    %v699 = vand.u32 %v698, 4294901760
    %700 = vmatmul.mubr.f32.gmra.mrb[0].mxu0 %v699
    %v701 = vpop.f32.mrb[0].mxu0
    %v702 = vadd.f32 %v538, %v701
    %v703 = vpop.f32.mrb[0].mxu0
    %704 = vmatprep.mubr.f32.mxu0 0.0
    %v705 = vand.u32 %v56, 4294901760
    %v706 = vsub.f32 %v56, %v705
    %v707 = vand.u32 %v706, 4294901760
    %708 = vmatmul.mubr.f32.gmra.mrb[0].mxu0 %v707
    %v709 = vpop.f32.mrb[0].mxu0
    %v710 = vadd.f32 %v545, %v709
    %v711 = vpop.f32.mrb[0].mxu0
    %712 = vmatprep.mubr.f32.mxu0 0.0
    %v713 = vand.u32 %v59, 4294901760
    %v714 = vsub.f32 %v59, %v713
    %v715 = vand.u32 %v714, 4294901760
    %716 = vmatmul.mubr.f32.gmra.mrb[0].mxu0 %v715
    %v717 = vpop.f32.mrb[0].mxu0
    %v718 = vadd.f32 %v552, %v717
    %v719 = vpop.f32.mrb[0].mxu0
    %720 = vmatprep.mubr.f32.mxu0 0.0
    %v721 = vand.u32 %v62, 4294901760
    %v722 = vsub.f32 %v62, %v721
    %v723 = vand.u32 %v722, 4294901760
    %724 = vmatmul.mubr.f32.gmra.mrb[0].mxu0 %v723
    %v725 = vpop.f32.mrb[0].mxu0
    %v726 = vadd.f32 %v559, %v725
    %v727 = vpop.f32.mrb[0].mxu0
    %728 = vmatprep.mubr.f32.mxu0 0.0
    %v729 = vand.u32 %v65, 4294901760
    %v730 = vsub.f32 %v65, %v729
    %v731 = vand.u32 %v730, 4294901760
    %732 = vmatmul.mubr.f32.gmra.mrb[0].mxu0 %v731
    %v733 = vpop.f32.mrb[0].mxu0
    %v734 = vadd.f32 %v566, %v733
    %v735 = vpop.f32.mrb[0].mxu0
    %736 = vmatprep.mubr.f32.mxu0 0.0
    %v737 = vand.u32 %v68, 4294901760
    %v738 = vsub.f32 %v68, %v737
    %v739 = vand.u32 %v738, 4294901760
    %740 = vmatmul.mubr.f32.gmra.mrb[0].mxu0 %v739
    %v741 = vpop.f32.mrb[0].mxu0
    %v742 = vadd.f32 %v573, %v741
    %v743 = vpop.f32.mrb[0].mxu0
    %744 = vmatprep.mubr.f32.mxu0 0.0
    %v745 = vand.u32 %v71, 4294901760
    %v746 = vsub.f32 %v71, %v745
    %v747 = vand.u32 %v746, 4294901760
    %748 = vmatmul.mubr.f32.gmra.mrb[0].mxu0 %v747
    %v749 = vpop.f32.mrb[0].mxu0
    %v750 = vadd.f32 %v580, %v749
    %v751 = vpop.f32.mrb[0].mxu0
    %752 = vmatprep.mubr.f32.mxu0 0.0
    %v753 = vand.u32 %v74, 4294901760
    %v754 = vsub.f32 %v74, %v753
    %v755 = vand.u32 %v754, 4294901760
    %756 = vmatmul.mubr.f32.gmra.mrb[0].mxu0 %v755
    %v757 = vpop.f32.mrb[0].mxu0
    %v758 = vadd.f32 %v587, %v757
    %v759 = vpop.f32.mrb[0].mxu0
    %760 = vdwg.mxu0
    %761 = vmatprep.subr.mxu0 0.0
    %v762 = vand.u32 %v34, 4294901760
    %v763 = vsub.f32 %v34, %v762
    %v764 = vand.u32 %v763, 4294901760
    %765 = vmatpush1.msra.mxu0 %v764
    %766 = vmatprep.subr.mxu0 0.0
    %v767 = vand.u32 %v78, 4294901760
    %v768 = vsub.f32 %v78, %v767
    %v769 = vand.u32 %v768, 4294901760
    %770 = vmatpush1.msra.mxu0 %v769
    %771 = vmatprep.subr.mxu0 0.0
    %772 = vmatpush1.msra.mxu0 0.0
    %773 = vmatprep.subr.mxu0 0.0
    %774 = vmatpush1.msra.mxu0 0.0
    %775 = vmatprep.subr.mxu0 0.0
    %776 = vmatpush1.msra.mxu0 0.0
    %777 = vmatprep.subr.mxu0 0.0
    %778 = vmatpush1.msra.mxu0 0.0
    %779 = vmatprep.subr.mxu0 0.0
    %780 = vmatpush1.msra.mxu0 0.0
    %781 = vmatprep.subr.mxu0 0.0
    %782 = vmatpush1.msra.mxu0 0.0
    %783 = vmatprep.subr.mxu0 0.0
    %784 = vmatpush1.msra.mxu0 0.0
    %785 = vmatprep.subr.mxu0 0.0
    %786 = vmatpush1.msra.mxu0 0.0
    %787 = vmatprep.subr.mxu0 0.0
    %788 = vmatpush1.msra.mxu0 0.0
    %789 = vmatprep.subr.mxu0 0.0
    %790 = vmatpush1.msra.mxu0 0.0
    %791 = vmatprep.subr.mxu0 0.0
    %792 = vmatpush1.msra.mxu0 0.0
    %793 = vmatprep.subr.mxu0 0.0
    %794 = vmatpush1.msra.mxu0 0.0
    %795 = vmatprep.subr.mxu0 0.0
    %796 = vmatpush1.msra.mxu0 0.0
    %797 = vmatprep.subr.mxu0 0.0
    %798 = vmatpush1.msra.mxu0 0.0
    %799 = vmatprep.subr.mxu0 0.0
    %800 = vmatpush1.msra.mxu0 0.0
    %801 = vmatprep.subr.mxu0 0.0
    %802 = vmatpush1.msra.mxu0 0.0
    %803 = vmatprep.subr.mxu0 0.0
    %804 = vmatpush1.msra.mxu0 0.0
    %805 = vmatprep.subr.mxu0 0.0
    %806 = vmatpush1.msra.mxu0 0.0
    %807 = vmatprep.subr.mxu0 0.0
    %808 = vmatpush1.msra.mxu0 0.0
    %809 = vmatprep.subr.mxu0 0.0
    %810 = vmatpush1.msra.mxu0 0.0
    %811 = vmatprep.subr.mxu0 0.0
    %812 = vmatpush1.msra.mxu0 0.0
    %813 = vmatprep.subr.mxu0 0.0
    %814 = vmatpush1.msra.mxu0 0.0
    %815 = vmatprep.subr.mxu0 0.0
    %816 = vmatpush1.msra.mxu0 0.0
    %817 = vmatprep.subr.mxu0 0.0
    %818 = vmatpush1.msra.mxu0 0.0
    %819 = vmatprep.subr.mxu0 0.0
    %820 = vmatpush1.msra.mxu0 0.0
    %821 = vmatprep.subr.mxu0 0.0
    %822 = vmatpush1.msra.mxu0 0.0
    %823 = vmatprep.subr.mxu0 0.0
    %824 = vmatpush1.msra.mxu0 0.0
    %825 = vmatprep.subr.mxu0 0.0
    %826 = vmatpush1.msra.mxu0 0.0
    %827 = vmatprep.subr.mxu0 0.0
    %828 = vmatpush1.msra.mxu0 0.0
    %829 = vmatprep.subr.mxu0 0.0
    %830 = vmatpush1.msra.mxu0 0.0
    %831 = vmatprep.mubr.f32.mxu0 0.0
    %v832 = vand.u32 %v38, 4294901760
    %833 = vmatmul.mubr.f32.gmra.mrb[0].mxu0 %v832
    %v834 = vpop.f32.mrb[0].mxu0
    %v835 = vadd.f32 %v662, %v834
    %v836 = vpop.f32.mrb[0].mxu0
    %837 = vmatprep.mubr.f32.mxu0 0.0
    %v838 = vand.u32 %v41, 4294901760
    %839 = vmatmul.mubr.f32.gmra.mrb[0].mxu0 %v838
    %v840 = vpop.f32.mrb[0].mxu0
    %v841 = vadd.f32 %v670, %v840
    %v842 = vpop.f32.mrb[0].mxu0
    %843 = vmatprep.mubr.f32.mxu0 0.0
    %v844 = vand.u32 %v44, 4294901760
    %845 = vmatmul.mubr.f32.gmra.mrb[0].mxu0 %v844
    %v846 = vpop.f32.mrb[0].mxu0
    %v847 = vadd.f32 %v678, %v846
    %v848 = vpop.f32.mrb[0].mxu0
    %849 = vmatprep.mubr.f32.mxu0 0.0
    %v850 = vand.u32 %v47, 4294901760
    %851 = vmatmul.mubr.f32.gmra.mrb[0].mxu0 %v850
    %v852 = vpop.f32.mrb[0].mxu0
    %v853 = vadd.f32 %v686, %v852
    %v854 = vpop.f32.mrb[0].mxu0
    %855 = vmatprep.mubr.f32.mxu0 0.0
    %v856 = vand.u32 %v50, 4294901760
    %857 = vmatmul.mubr.f32.gmra.mrb[0].mxu0 %v856
    %v858 = vpop.f32.mrb[0].mxu0
    %v859 = vadd.f32 %v694, %v858
    %v860 = vpop.f32.mrb[0].mxu0
    %861 = vmatprep.mubr.f32.mxu0 0.0
    %v862 = vand.u32 %v53, 4294901760
    %863 = vmatmul.mubr.f32.gmra.mrb[0].mxu0 %v862
    %v864 = vpop.f32.mrb[0].mxu0
    %v865 = vadd.f32 %v702, %v864
    %v866 = vpop.f32.mrb[0].mxu0
    %867 = vmatprep.mubr.f32.mxu0 0.0
    %v868 = vand.u32 %v56, 4294901760
    %869 = vmatmul.mubr.f32.gmra.mrb[0].mxu0 %v868
    %v870 = vpop.f32.mrb[0].mxu0
    %v871 = vadd.f32 %v710, %v870
    %v872 = vpop.f32.mrb[0].mxu0
    %873 = vmatprep.mubr.f32.mxu0 0.0
    %v874 = vand.u32 %v59, 4294901760
    %875 = vmatmul.mubr.f32.gmra.mrb[0].mxu0 %v874
    %v876 = vpop.f32.mrb[0].mxu0
    %v877 = vadd.f32 %v718, %v876
    %v878 = vpop.f32.mrb[0].mxu0
    %879 = vmatprep.mubr.f32.mxu0 0.0
    %v880 = vand.u32 %v62, 4294901760
    %881 = vmatmul.mubr.f32.gmra.mrb[0].mxu0 %v880
    %v882 = vpop.f32.mrb[0].mxu0
    %v883 = vadd.f32 %v726, %v882
    %v884 = vpop.f32.mrb[0].mxu0
    %885 = vmatprep.mubr.f32.mxu0 0.0
    %v886 = vand.u32 %v65, 4294901760
    %887 = vmatmul.mubr.f32.gmra.mrb[0].mxu0 %v886
    %v888 = vpop.f32.mrb[0].mxu0
    %v889 = vadd.f32 %v734, %v888
    %v890 = vpop.f32.mrb[0].mxu0
    %891 = vmatprep.mubr.f32.mxu0 0.0
    %v892 = vand.u32 %v68, 4294901760
    %893 = vmatmul.mubr.f32.gmra.mrb[0].mxu0 %v892
    %v894 = vpop.f32.mrb[0].mxu0
    %v895 = vadd.f32 %v742, %v894
    %v896 = vpop.f32.mrb[0].mxu0
    %897 = vmatprep.mubr.f32.mxu0 0.0
    %v898 = vand.u32 %v71, 4294901760
    %899 = vmatmul.mubr.f32.gmra.mrb[0].mxu0 %v898
    %v900 = vpop.f32.mrb[0].mxu0
    %v901 = vadd.f32 %v750, %v900
    %v902 = vpop.f32.mrb[0].mxu0
    %903 = vmatprep.mubr.f32.mxu0 0.0
    %v904 = vand.u32 %v74, 4294901760
    %905 = vmatmul.mubr.f32.gmra.mrb[0].mxu0 %v904
    %v906 = vpop.f32.mrb[0].mxu0
    %v907 = vadd.f32 %v758, %v906
    %v908 = vpop.f32.mrb[0].mxu0
    %909 = vdwg.mxu0
    %910 = vmatprep.subr.mxu0 0.0
    %v911 = vand.u32 %v34, 4294901760
    %912 = vmatpush1.msra.mxu0 %v911
    %913 = vmatprep.subr.mxu0 0.0
    %v914 = vand.u32 %v78, 4294901760
    %915 = vmatpush1.msra.mxu0 %v914
    %916 = vmatprep.subr.mxu0 0.0
    %917 = vmatpush1.msra.mxu0 0.0
    %918 = vmatprep.subr.mxu0 0.0
    %919 = vmatpush1.msra.mxu0 0.0
    %920 = vmatprep.subr.mxu0 0.0
    %921 = vmatpush1.msra.mxu0 0.0
    %922 = vmatprep.subr.mxu0 0.0
    %923 = vmatpush1.msra.mxu0 0.0
    %924 = vmatprep.subr.mxu0 0.0
    %925 = vmatpush1.msra.mxu0 0.0
    %926 = vmatprep.subr.mxu0 0.0
    %927 = vmatpush1.msra.mxu0 0.0
    %928 = vmatprep.subr.mxu0 0.0
    %929 = vmatpush1.msra.mxu0 0.0
    %930 = vmatprep.subr.mxu0 0.0
    %931 = vmatpush1.msra.mxu0 0.0
    %932 = vmatprep.subr.mxu0 0.0
    %933 = vmatpush1.msra.mxu0 0.0
    %934 = vmatprep.subr.mxu0 0.0
    %935 = vmatpush1.msra.mxu0 0.0
    %936 = vmatprep.subr.mxu0 0.0
    %937 = vmatpush1.msra.mxu0 0.0
    %938 = vmatprep.subr.mxu0 0.0
    %939 = vmatpush1.msra.mxu0 0.0
    %940 = vmatprep.subr.mxu0 0.0
    %941 = vmatpush1.msra.mxu0 0.0
    %942 = vmatprep.subr.mxu0 0.0
    %943 = vmatpush1.msra.mxu0 0.0
    %944 = vmatprep.subr.mxu0 0.0
    %945 = vmatpush1.msra.mxu0 0.0
    %946 = vmatprep.subr.mxu0 0.0
    %947 = vmatpush1.msra.mxu0 0.0
    %948 = vmatprep.subr.mxu0 0.0
    %949 = vmatpush1.msra.mxu0 0.0
    %950 = vmatprep.subr.mxu0 0.0
    %951 = vmatpush1.msra.mxu0 0.0
    %952 = vmatprep.subr.mxu0 0.0
    %953 = vmatpush1.msra.mxu0 0.0
    %954 = vmatprep.subr.mxu0 0.0
    %955 = vmatpush1.msra.mxu0 0.0
    %956 = vmatprep.subr.mxu0 0.0
    %957 = vmatpush1.msra.mxu0 0.0
    %958 = vmatprep.subr.mxu0 0.0
    %959 = vmatpush1.msra.mxu0 0.0
    %960 = vmatprep.subr.mxu0 0.0
    %961 = vmatpush1.msra.mxu0 0.0
    %962 = vmatprep.subr.mxu0 0.0
    %963 = vmatpush1.msra.mxu0 0.0
    %964 = vmatprep.subr.mxu0 0.0
    %965 = vmatpush1.msra.mxu0 0.0
    %966 = vmatprep.subr.mxu0 0.0
    %967 = vmatpush1.msra.mxu0 0.0
    %968 = vmatprep.subr.mxu0 0.0
    %969 = vmatpush1.msra.mxu0 0.0
    %970 = vmatprep.subr.mxu0 0.0
    %971 = vmatpush1.msra.mxu0 0.0
    %972 = vmatprep.subr.mxu0 0.0
    %973 = vmatpush1.msra.mxu0 0.0
    %974 = vmatprep.subr.mxu0 0.0
    %975 = vmatpush1.msra.mxu0 0.0
    %976 = vmatprep.mubr.f32.mxu0 0.0
    %v977 = vand.u32 %v38, 4294901760
    %978 = vmatmul.mubr.f32.gmra.mrb[0].mxu0 %v977
    %v979 = vpop.f32.mrb[0].mxu0
    %v980 = vadd.f32 %v835, %v979
    %v981 = vpop.f32.mrb[0].mxu0
    %982 = vmatprep.mubr.f32.mxu0 0.0
    %v983 = vand.u32 %v41, 4294901760
    %984 = vmatmul.mubr.f32.gmra.mrb[0].mxu0 %v983
    %v985 = vpop.f32.mrb[0].mxu0
    %v986 = vadd.f32 %v841, %v985
    %v987 = vpop.f32.mrb[0].mxu0
    %988 = vmatprep.mubr.f32.mxu0 0.0
    %v989 = vand.u32 %v44, 4294901760
    %990 = vmatmul.mubr.f32.gmra.mrb[0].mxu0 %v989
    %v991 = vpop.f32.mrb[0].mxu0
    %v992 = vadd.f32 %v847, %v991
    %v993 = vpop.f32.mrb[0].mxu0
    %994 = vmatprep.mubr.f32.mxu0 0.0
    %v995 = vand.u32 %v47, 4294901760
    %996 = vmatmul.mubr.f32.gmra.mrb[0].mxu0 %v995
    %v997 = vpop.f32.mrb[0].mxu0
    %v998 = vadd.f32 %v853, %v997
    %v999 = vpop.f32.mrb[0].mxu0
    %1000 = vmatprep.mubr.f32.mxu0 0.0
    %v1001 = vand.u32 %v50, 4294901760
    %1002 = vmatmul.mubr.f32.gmra.mrb[0].mxu0 %v1001
    %v1003 = vpop.f32.mrb[0].mxu0
    %v1004 = vadd.f32 %v859, %v1003
    %v1005 = vpop.f32.mrb[0].mxu0
    %1006 = vmatprep.mubr.f32.mxu0 0.0
    %v1007 = vand.u32 %v53, 4294901760
    %1008 = vmatmul.mubr.f32.gmra.mrb[0].mxu0 %v1007
    %v1009 = vpop.f32.mrb[0].mxu0
    %v1010 = vadd.f32 %v865, %v1009
    %v1011 = vpop.f32.mrb[0].mxu0
    %1012 = vmatprep.mubr.f32.mxu0 0.0
    %v1013 = vand.u32 %v56, 4294901760
    %1014 = vmatmul.mubr.f32.gmra.mrb[0].mxu0 %v1013
    %v1015 = vpop.f32.mrb[0].mxu0
    %v1016 = vadd.f32 %v871, %v1015
    %v1017 = vpop.f32.mrb[0].mxu0
    %1018 = vmatprep.mubr.f32.mxu0 0.0
    %v1019 = vand.u32 %v59, 4294901760
    %1020 = vmatmul.mubr.f32.gmra.mrb[0].mxu0 %v1019
    %v1021 = vpop.f32.mrb[0].mxu0
    %v1022 = vadd.f32 %v877, %v1021
    %v1023 = vpop.f32.mrb[0].mxu0
    %1024 = vmatprep.mubr.f32.mxu0 0.0
    %v1025 = vand.u32 %v62, 4294901760
    %1026 = vmatmul.mubr.f32.gmra.mrb[0].mxu0 %v1025
    %v1027 = vpop.f32.mrb[0].mxu0
    %v1028 = vadd.f32 %v883, %v1027
    %v1029 = vpop.f32.mrb[0].mxu0
    %1030 = vmatprep.mubr.f32.mxu0 0.0
    %v1031 = vand.u32 %v65, 4294901760
    %1032 = vmatmul.mubr.f32.gmra.mrb[0].mxu0 %v1031
    %v1033 = vpop.f32.mrb[0].mxu0
    %v1034 = vadd.f32 %v889, %v1033
    %v1035 = vpop.f32.mrb[0].mxu0
    %1036 = vmatprep.mubr.f32.mxu0 0.0
    %v1037 = vand.u32 %v68, 4294901760
    %1038 = vmatmul.mubr.f32.gmra.mrb[0].mxu0 %v1037
    %v1039 = vpop.f32.mrb[0].mxu0
    %v1040 = vadd.f32 %v895, %v1039
    %v1041 = vpop.f32.mrb[0].mxu0
    %1042 = vmatprep.mubr.f32.mxu0 0.0
    %v1043 = vand.u32 %v71, 4294901760
    %1044 = vmatmul.mubr.f32.gmra.mrb[0].mxu0 %v1043
    %v1045 = vpop.f32.mrb[0].mxu0
    %v1046 = vadd.f32 %v901, %v1045
    %v1047 = vpop.f32.mrb[0].mxu0
    %1048 = vmatprep.mubr.f32.mxu0 0.0
    %v1049 = vand.u32 %v74, 4294901760
    %1050 = vmatmul.mubr.f32.gmra.mrb[0].mxu0 %v1049
    %v1051 = vpop.f32.mrb[0].mxu0
    %v1052 = vadd.f32 %v907, %v1051
    %v1053 = vpop.f32.mrb[0].mxu0
    %1054 = vdwg.mxu0
    %v1055 = vld [vmem:[%s0] sm:$0xff]
    %v1056 = vld [vmem:[%s0 + $0x8] sm:$0xff]
    %v1057 = vld [vmem:[%s0 + $0x10] sm:$0xff]
    %v1058 = vld [vmem:[%s0 + $0x18] sm:$0xff]
    %v1059 = vld [vmem:[%s0 + $0x20] sm:$0xff]
    %v1060 = vld [vmem:[%s0 + $0x28] sm:$0xff]
    %v1061 = vld [vmem:[%s0 + $0x30] sm:$0xff]
    %v1062 = vld [vmem:[%s0 + $0x38] sm:$0xff]
    %v1063 = vld [vmem:[%s0 + $0x40] sm:$0xff]
    %v1064 = vld [vmem:[%s0 + $0x48] sm:$0xff]
    %v1065 = vld [vmem:[%s0 + $0x50] sm:$0xff]
    %v1066 = vld [vmem:[%s0 + $0x58] sm:$0xff]
    %v1067 = vld [vmem:[%s0 + $0x60] sm:$0xf]
    %v1068 = vmul.f32 %v1055, %v980
    %v1069 = vmul.f32 %v1056, %v986
    %v1070 = vmul.f32 %v1057, %v992
    %v1071 = vmul.f32 %v1058, %v998
    %v1072 = vmul.f32 %v1059, %v1004
    %v1073 = vmul.f32 %v1060, %v1010
    %v1074 = vmul.f32 %v1061, %v1016
    %v1075 = vmul.f32 %v1062, %v1022
    %v1076 = vmul.f32 %v1063, %v1028
    %v1077 = vmul.f32 %v1064, %v1034
    %v1078 = vmul.f32 %v1065, %v1040
    %v1079 = vmul.f32 %v1066, %v1046
    %v1080 = vmul.f32 %v1067, %v1052
    %v1081 = vld [vmem:[%s4] sm:$0xff]
    %v1082 = vld [vmem:[%s4 + $0x8] sm:$0x3]
    %vm1083 = vcmask 818176
    %v1085 = vsel %vm1083, %v1081, 0
    %v1088 = vsel %vm1083, %v1082, 0
    %vm1090 = vcmask 1043456
    %v1092 = vsel %vm1090, %v1080, 0
    %1094 = vmatprep.subr.mxu0 0.0
    %v1095 = vand.u32 %v1068, 4294901760
    %1096 = vmatpush1.msra.mxu0 %v1095
    %1097 = vmatprep.subr.mxu0 0.0
    %v1098 = vand.u32 %v1069, 4294901760
    %1099 = vmatpush1.msra.mxu0 %v1098
    %1100 = vmatprep.subr.mxu0 0.0
    %v1101 = vand.u32 %v1070, 4294901760
    %1102 = vmatpush1.msra.mxu0 %v1101
    %1103 = vmatprep.subr.mxu0 0.0
    %v1104 = vand.u32 %v1071, 4294901760
    %1105 = vmatpush1.msra.mxu0 %v1104
    %1106 = vmatprep.subr.mxu0 0.0
    %v1107 = vand.u32 %v1072, 4294901760
    %1108 = vmatpush1.msra.mxu0 %v1107
    %1109 = vmatprep.subr.mxu0 0.0
    %v1110 = vand.u32 %v1073, 4294901760
    %1111 = vmatpush1.msra.mxu0 %v1110
    %1112 = vmatprep.subr.mxu0 0.0
    %v1113 = vand.u32 %v1074, 4294901760
    %1114 = vmatpush1.msra.mxu0 %v1113
    %1115 = vmatprep.subr.mxu0 0.0
    %v1116 = vand.u32 %v1075, 4294901760
    %1117 = vmatpush1.msra.mxu0 %v1116
    %1118 = vmatprep.subr.mxu0 0.0
    %v1119 = vand.u32 %v1076, 4294901760
    %1120 = vmatpush1.msra.mxu0 %v1119
    %1121 = vmatprep.subr.mxu0 0.0
    %v1122 = vand.u32 %v1077, 4294901760
    %1123 = vmatpush1.msra.mxu0 %v1122
    %1124 = vmatprep.subr.mxu0 0.0
    %v1125 = vand.u32 %v1078, 4294901760
    %1126 = vmatpush1.msra.mxu0 %v1125
    %1127 = vmatprep.subr.mxu0 0.0
    %v1128 = vand.u32 %v1079, 4294901760
    %1129 = vmatpush1.msra.mxu0 %v1128
    %1130 = vmatprep.subr.mxu0 0.0
    %v1131 = vand.u32 %v1092, 4294901760
    %1132 = vmatpush1.msra.mxu0 %v1131
    %1133 = vmatprep.subr.mxu0 0.0
    %1134 = vmatpush1.msra.mxu0 0.0
    %1135 = vmatprep.subr.mxu0 0.0
    %1136 = vmatpush1.msra.mxu0 0.0
    %1137 = vmatprep.subr.mxu0 0.0
    %1138 = vmatpush1.msra.mxu0 0.0
    %1139 = vmatprep.subr.mxu0 0.0
    %1140 = vmatpush1.msra.mxu0 0.0
    %1141 = vmatprep.subr.mxu0 0.0
    %1142 = vmatpush1.msra.mxu0 0.0
    %1143 = vmatprep.subr.mxu0 0.0
    %1144 = vmatpush1.msra.mxu0 0.0
    %1145 = vmatprep.subr.mxu0 0.0
    %1146 = vmatpush1.msra.mxu0 0.0
    %1147 = vmatprep.subr.mxu0 0.0
    %1148 = vmatpush1.msra.mxu0 0.0
    %1149 = vmatprep.subr.mxu0 0.0
    %1150 = vmatpush1.msra.mxu0 0.0
    %1151 = vmatprep.subr.mxu0 0.0
    %1152 = vmatpush1.msra.mxu0 0.0
    %1153 = vmatprep.subr.mxu0 0.0
    %1154 = vmatpush1.msra.mxu0 0.0
    %1155 = vmatprep.subr.mxu0 0.0
    %1156 = vmatpush1.msra.mxu0 0.0
    %1157 = vmatprep.subr.mxu0 0.0
    %1158 = vmatpush1.msra.mxu0 0.0
    %1159 = vmatprep.subr.mxu0 0.0
    %1160 = vmatpush1.msra.mxu0 0.0
    %1161 = vmatprep.subr.mxu0 0.0
    %1162 = vmatpush1.msra.mxu0 0.0
    %1163 = vmatprep.subr.mxu0 0.0
    %1164 = vmatpush1.msra.mxu0 0.0
    %1165 = vmatprep.subr.mxu0 0.0
    %1166 = vmatpush1.msra.mxu0 0.0
    %1167 = vmatprep.subr.mxu0 0.0
    %1168 = vmatpush1.msra.mxu0 0.0
    %1169 = vmatprep.subr.mxu0 0.0
    %1170 = vmatpush1.msra.mxu0 0.0
    %1171 = vmatprep.mubr.f32.mxu0 0.0
    %v1172 = vand.u32 %v1085, 4294901760
    %v1173 = vsub.f32 %v1085, %v1172
    %v1174 = vand.u32 %v1173, 4294901760
    %v1175 = vsub.f32 %v1173, %v1174
    %v1176 = vand.u32 %v1175, 4294901760
    %1177 = vmatmul.mubr.f32.gmra.mrb[0].mxu0 %v1176
    %v1178 = vpop.f32.mrb[0].mxu0
    %v1179 = vadd.f32 0.0, %v1178
    %v1180 = vpop.f32.mrb[0].mxu0
    %1181 = vmatprep.mubr.f32.mxu0 0.0
    %v1182 = vand.u32 %v1088, 4294901760
    %v1183 = vsub.f32 %v1088, %v1182
    %v1184 = vand.u32 %v1183, 4294901760
    %v1185 = vsub.f32 %v1183, %v1184
    %v1186 = vand.u32 %v1185, 4294901760
    %1187 = vmatmul.mubr.f32.gmra.mrb[0].mxu0 %v1186
    %v1188 = vpop.f32.mrb[0].mxu0
    %v1189 = vadd.f32 0.0, %v1188
    %v1190 = vpop.f32.mrb[0].mxu0
    %1191 = vdwg.mxu0
    %1192 = vmatprep.subr.mxu0 0.0
    %v1193 = vand.u32 %v1068, 4294901760
    %v1194 = vsub.f32 %v1068, %v1193
    %v1195 = vand.u32 %v1194, 4294901760
    %v1196 = vsub.f32 %v1194, %v1195
    %v1197 = vand.u32 %v1196, 4294901760
    %1198 = vmatpush1.msra.mxu0 %v1197
    %1199 = vmatprep.subr.mxu0 0.0
    %v1200 = vand.u32 %v1069, 4294901760
    %v1201 = vsub.f32 %v1069, %v1200
    %v1202 = vand.u32 %v1201, 4294901760
    %v1203 = vsub.f32 %v1201, %v1202
    %v1204 = vand.u32 %v1203, 4294901760
    %1205 = vmatpush1.msra.mxu0 %v1204
    %1206 = vmatprep.subr.mxu0 0.0
    %v1207 = vand.u32 %v1070, 4294901760
    %v1208 = vsub.f32 %v1070, %v1207
    %v1209 = vand.u32 %v1208, 4294901760
    %v1210 = vsub.f32 %v1208, %v1209
    %v1211 = vand.u32 %v1210, 4294901760
    %1212 = vmatpush1.msra.mxu0 %v1211
    %1213 = vmatprep.subr.mxu0 0.0
    %v1214 = vand.u32 %v1071, 4294901760
    %v1215 = vsub.f32 %v1071, %v1214
    %v1216 = vand.u32 %v1215, 4294901760
    %v1217 = vsub.f32 %v1215, %v1216
    %v1218 = vand.u32 %v1217, 4294901760
    %1219 = vmatpush1.msra.mxu0 %v1218
    %1220 = vmatprep.subr.mxu0 0.0
    %v1221 = vand.u32 %v1072, 4294901760
    %v1222 = vsub.f32 %v1072, %v1221
    %v1223 = vand.u32 %v1222, 4294901760
    %v1224 = vsub.f32 %v1222, %v1223
    %v1225 = vand.u32 %v1224, 4294901760
    %1226 = vmatpush1.msra.mxu0 %v1225
    %1227 = vmatprep.subr.mxu0 0.0
    %v1228 = vand.u32 %v1073, 4294901760
    %v1229 = vsub.f32 %v1073, %v1228
    %v1230 = vand.u32 %v1229, 4294901760
    %v1231 = vsub.f32 %v1229, %v1230
    %v1232 = vand.u32 %v1231, 4294901760
    %1233 = vmatpush1.msra.mxu0 %v1232
    %1234 = vmatprep.subr.mxu0 0.0
    %v1235 = vand.u32 %v1074, 4294901760
    %v1236 = vsub.f32 %v1074, %v1235
    %v1237 = vand.u32 %v1236, 4294901760
    %v1238 = vsub.f32 %v1236, %v1237
    %v1239 = vand.u32 %v1238, 4294901760
    %1240 = vmatpush1.msra.mxu0 %v1239
    %1241 = vmatprep.subr.mxu0 0.0
    %v1242 = vand.u32 %v1075, 4294901760
    %v1243 = vsub.f32 %v1075, %v1242
    %v1244 = vand.u32 %v1243, 4294901760
    %v1245 = vsub.f32 %v1243, %v1244
    %v1246 = vand.u32 %v1245, 4294901760
    %1247 = vmatpush1.msra.mxu0 %v1246
    %1248 = vmatprep.subr.mxu0 0.0
    %v1249 = vand.u32 %v1076, 4294901760
    %v1250 = vsub.f32 %v1076, %v1249
    %v1251 = vand.u32 %v1250, 4294901760
    %v1252 = vsub.f32 %v1250, %v1251
    %v1253 = vand.u32 %v1252, 4294901760
    %1254 = vmatpush1.msra.mxu0 %v1253
    %1255 = vmatprep.subr.mxu0 0.0
    %v1256 = vand.u32 %v1077, 4294901760
    %v1257 = vsub.f32 %v1077, %v1256
    %v1258 = vand.u32 %v1257, 4294901760
    %v1259 = vsub.f32 %v1257, %v1258
    %v1260 = vand.u32 %v1259, 4294901760
    %1261 = vmatpush1.msra.mxu0 %v1260
    %1262 = vmatprep.subr.mxu0 0.0
    %v1263 = vand.u32 %v1078, 4294901760
    %v1264 = vsub.f32 %v1078, %v1263
    %v1265 = vand.u32 %v1264, 4294901760
    %v1266 = vsub.f32 %v1264, %v1265
    %v1267 = vand.u32 %v1266, 4294901760
    %1268 = vmatpush1.msra.mxu0 %v1267
    %1269 = vmatprep.subr.mxu0 0.0
    %v1270 = vand.u32 %v1079, 4294901760
    %v1271 = vsub.f32 %v1079, %v1270
    %v1272 = vand.u32 %v1271, 4294901760
    %v1273 = vsub.f32 %v1271, %v1272
    %v1274 = vand.u32 %v1273, 4294901760
    %1275 = vmatpush1.msra.mxu0 %v1274
    %1276 = vmatprep.subr.mxu0 0.0
    %v1277 = vand.u32 %v1092, 4294901760
    %v1278 = vsub.f32 %v1092, %v1277
    %v1279 = vand.u32 %v1278, 4294901760
    %v1280 = vsub.f32 %v1278, %v1279
    %v1281 = vand.u32 %v1280, 4294901760
    %1282 = vmatpush1.msra.mxu0 %v1281
    %1283 = vmatprep.subr.mxu0 0.0
    %1284 = vmatpush1.msra.mxu0 0.0
    %1285 = vmatprep.subr.mxu0 0.0
    %1286 = vmatpush1.msra.mxu0 0.0
    %1287 = vmatprep.subr.mxu0 0.0
    %1288 = vmatpush1.msra.mxu0 0.0
    %1289 = vmatprep.subr.mxu0 0.0
    %1290 = vmatpush1.msra.mxu0 0.0
    %1291 = vmatprep.subr.mxu0 0.0
    %1292 = vmatpush1.msra.mxu0 0.0
    %1293 = vmatprep.subr.mxu0 0.0
    %1294 = vmatpush1.msra.mxu0 0.0
    %1295 = vmatprep.subr.mxu0 0.0
    %1296 = vmatpush1.msra.mxu0 0.0
    %1297 = vmatprep.subr.mxu0 0.0
    %1298 = vmatpush1.msra.mxu0 0.0
    %1299 = vmatprep.subr.mxu0 0.0
    %1300 = vmatpush1.msra.mxu0 0.0
    %1301 = vmatprep.subr.mxu0 0.0
    %1302 = vmatpush1.msra.mxu0 0.0
    %1303 = vmatprep.subr.mxu0 0.0
    %1304 = vmatpush1.msra.mxu0 0.0
    %1305 = vmatprep.subr.mxu0 0.0
    %1306 = vmatpush1.msra.mxu0 0.0
    %1307 = vmatprep.subr.mxu0 0.0
    %1308 = vmatpush1.msra.mxu0 0.0
    %1309 = vmatprep.subr.mxu0 0.0
    %1310 = vmatpush1.msra.mxu0 0.0
    %1311 = vmatprep.subr.mxu0 0.0
    %1312 = vmatpush1.msra.mxu0 0.0
    %1313 = vmatprep.subr.mxu0 0.0
    %1314 = vmatpush1.msra.mxu0 0.0
    %1315 = vmatprep.subr.mxu0 0.0
    %1316 = vmatpush1.msra.mxu0 0.0
    %1317 = vmatprep.subr.mxu0 0.0
    %1318 = vmatpush1.msra.mxu0 0.0
    %1319 = vmatprep.subr.mxu0 0.0
    %1320 = vmatpush1.msra.mxu0 0.0
    %1321 = vmatprep.mubr.f32.mxu0 0.0
    %v1322 = vand.u32 %v1085, 4294901760
    %1323 = vmatmul.mubr.f32.gmra.mrb[0].mxu0 %v1322
    %v1324 = vpop.f32.mrb[0].mxu0
    %v1325 = vadd.f32 %v1179, %v1324
    %v1326 = vpop.f32.mrb[0].mxu0
    %1327 = vmatprep.mubr.f32.mxu0 0.0
    %v1328 = vand.u32 %v1088, 4294901760
    %1329 = vmatmul.mubr.f32.gmra.mrb[0].mxu0 %v1328
    %v1330 = vpop.f32.mrb[0].mxu0
    %v1331 = vadd.f32 %v1189, %v1330
    %v1332 = vpop.f32.mrb[0].mxu0
    %1333 = vdwg.mxu0
    %1334 = vmatprep.subr.mxu0 0.0
    %v1335 = vand.u32 %v1068, 4294901760
    %v1336 = vsub.f32 %v1068, %v1335
    %1337 = vmatpush1.msra.mxu0 %v1336
    %1338 = vmatprep.subr.mxu0 0.0
    %v1339 = vand.u32 %v1069, 4294901760
    %v1340 = vsub.f32 %v1069, %v1339
    %1341 = vmatpush1.msra.mxu0 %v1340
    %1342 = vmatprep.subr.mxu0 0.0
    %v1343 = vand.u32 %v1070, 4294901760
    %v1344 = vsub.f32 %v1070, %v1343
    %1345 = vmatpush1.msra.mxu0 %v1344
    %1346 = vmatprep.subr.mxu0 0.0
    %v1347 = vand.u32 %v1071, 4294901760
    %v1348 = vsub.f32 %v1071, %v1347
    %1349 = vmatpush1.msra.mxu0 %v1348
    %1350 = vmatprep.subr.mxu0 0.0
    %v1351 = vand.u32 %v1072, 4294901760
    %v1352 = vsub.f32 %v1072, %v1351
    %1353 = vmatpush1.msra.mxu0 %v1352
    %1354 = vmatprep.subr.mxu0 0.0
    %v1355 = vand.u32 %v1073, 4294901760
    %v1356 = vsub.f32 %v1073, %v1355
    %1357 = vmatpush1.msra.mxu0 %v1356
    %1358 = vmatprep.subr.mxu0 0.0
    %v1359 = vand.u32 %v1074, 4294901760
    %v1360 = vsub.f32 %v1074, %v1359
    %1361 = vmatpush1.msra.mxu0 %v1360
    %1362 = vmatprep.subr.mxu0 0.0
    %v1363 = vand.u32 %v1075, 4294901760
    %v1364 = vsub.f32 %v1075, %v1363
    %1365 = vmatpush1.msra.mxu0 %v1364
    %1366 = vmatprep.subr.mxu0 0.0
    %v1367 = vand.u32 %v1076, 4294901760
    %v1368 = vsub.f32 %v1076, %v1367
    %1369 = vmatpush1.msra.mxu0 %v1368
    %1370 = vmatprep.subr.mxu0 0.0
    %v1371 = vand.u32 %v1077, 4294901760
    %v1372 = vsub.f32 %v1077, %v1371
    %1373 = vmatpush1.msra.mxu0 %v1372
    %1374 = vmatprep.subr.mxu0 0.0
    %v1375 = vand.u32 %v1078, 4294901760
    %v1376 = vsub.f32 %v1078, %v1375
    %1377 = vmatpush1.msra.mxu0 %v1376
    %1378 = vmatprep.subr.mxu0 0.0
    %v1379 = vand.u32 %v1079, 4294901760
    %v1380 = vsub.f32 %v1079, %v1379
    %1381 = vmatpush1.msra.mxu0 %v1380
    %1382 = vmatprep.subr.mxu0 0.0
    %v1383 = vand.u32 %v1092, 4294901760
    %v1384 = vsub.f32 %v1092, %v1383
    %1385 = vmatpush1.msra.mxu0 %v1384
    %1386 = vmatprep.subr.mxu0 0.0
    %1387 = vmatpush1.msra.mxu0 0.0
    %1388 = vmatprep.subr.mxu0 0.0
    %1389 = vmatpush1.msra.mxu0 0.0
    %1390 = vmatprep.subr.mxu0 0.0
    %1391 = vmatpush1.msra.mxu0 0.0
    %1392 = vmatprep.subr.mxu0 0.0
    %1393 = vmatpush1.msra.mxu0 0.0
    %1394 = vmatprep.subr.mxu0 0.0
    %1395 = vmatpush1.msra.mxu0 0.0
    %1396 = vmatprep.subr.mxu0 0.0
    %1397 = vmatpush1.msra.mxu0 0.0
    %1398 = vmatprep.subr.mxu0 0.0
    %1399 = vmatpush1.msra.mxu0 0.0
    %1400 = vmatprep.subr.mxu0 0.0
    %1401 = vmatpush1.msra.mxu0 0.0
    %1402 = vmatprep.subr.mxu0 0.0
    %1403 = vmatpush1.msra.mxu0 0.0
    %1404 = vmatprep.subr.mxu0 0.0
    %1405 = vmatpush1.msra.mxu0 0.0
    %1406 = vmatprep.subr.mxu0 0.0
    %1407 = vmatpush1.msra.mxu0 0.0
    %1408 = vmatprep.subr.mxu0 0.0
    %1409 = vmatpush1.msra.mxu0 0.0
    %1410 = vmatprep.subr.mxu0 0.0
    %1411 = vmatpush1.msra.mxu0 0.0
    %1412 = vmatprep.subr.mxu0 0.0
    %1413 = vmatpush1.msra.mxu0 0.0
    %1414 = vmatprep.subr.mxu0 0.0
    %1415 = vmatpush1.msra.mxu0 0.0
    %1416 = vmatprep.subr.mxu0 0.0
    %1417 = vmatpush1.msra.mxu0 0.0
    %1418 = vmatprep.subr.mxu0 0.0
    %1419 = vmatpush1.msra.mxu0 0.0
    %1420 = vmatprep.subr.mxu0 0.0
    %1421 = vmatpush1.msra.mxu0 0.0
    %1422 = vmatprep.subr.mxu0 0.0
    %1423 = vmatpush1.msra.mxu0 0.0
    %1424 = vmatprep.mubr.f32.mxu0 0.0
    %v1425 = vand.u32 %v1085, 4294901760
    %v1426 = vsub.f32 %v1085, %v1425
    %1427 = vmatmul.mubr.f32.gmra.mrb[0].mxu0 %v1426
    %v1428 = vpop.f32.mrb[0].mxu0
    %v1429 = vadd.f32 %v1325, %v1428
    %v1430 = vpop.f32.mrb[0].mxu0
    %1431 = vmatprep.mubr.f32.mxu0 0.0
    %v1432 = vand.u32 %v1088, 4294901760
    %v1433 = vsub.f32 %v1088, %v1432
    %1434 = vmatmul.mubr.f32.gmra.mrb[0].mxu0 %v1433
    %v1435 = vpop.f32.mrb[0].mxu0
    %v1436 = vadd.f32 %v1331, %v1435
    %v1437 = vpop.f32.mrb[0].mxu0
    %1438 = vdwg.mxu0
    %1439 = vmatprep.subr.mxu0 0.0
    %v1440 = vand.u32 %v1068, 4294901760
    %1441 = vmatpush1.msra.mxu0 %v1440
    %1442 = vmatprep.subr.mxu0 0.0
    %v1443 = vand.u32 %v1069, 4294901760
    %1444 = vmatpush1.msra.mxu0 %v1443
    %1445 = vmatprep.subr.mxu0 0.0
    %v1446 = vand.u32 %v1070, 4294901760
    %1447 = vmatpush1.msra.mxu0 %v1446
    %1448 = vmatprep.subr.mxu0 0.0
    %v1449 = vand.u32 %v1071, 4294901760
    %1450 = vmatpush1.msra.mxu0 %v1449
    %1451 = vmatprep.subr.mxu0 0.0
    %v1452 = vand.u32 %v1072, 4294901760
    %1453 = vmatpush1.msra.mxu0 %v1452
    %1454 = vmatprep.subr.mxu0 0.0
    %v1455 = vand.u32 %v1073, 4294901760
    %1456 = vmatpush1.msra.mxu0 %v1455
    %1457 = vmatprep.subr.mxu0 0.0
    %v1458 = vand.u32 %v1074, 4294901760
    %1459 = vmatpush1.msra.mxu0 %v1458
    %1460 = vmatprep.subr.mxu0 0.0
    %v1461 = vand.u32 %v1075, 4294901760
    %1462 = vmatpush1.msra.mxu0 %v1461
    %1463 = vmatprep.subr.mxu0 0.0
    %v1464 = vand.u32 %v1076, 4294901760
    %1465 = vmatpush1.msra.mxu0 %v1464
    %1466 = vmatprep.subr.mxu0 0.0
    %v1467 = vand.u32 %v1077, 4294901760
    %1468 = vmatpush1.msra.mxu0 %v1467
    %1469 = vmatprep.subr.mxu0 0.0
    %v1470 = vand.u32 %v1078, 4294901760
    %1471 = vmatpush1.msra.mxu0 %v1470
    %1472 = vmatprep.subr.mxu0 0.0
    %v1473 = vand.u32 %v1079, 4294901760
    %1474 = vmatpush1.msra.mxu0 %v1473
    %1475 = vmatprep.subr.mxu0 0.0
    %v1476 = vand.u32 %v1092, 4294901760
    %1477 = vmatpush1.msra.mxu0 %v1476
    %1478 = vmatprep.subr.mxu0 0.0
    %1479 = vmatpush1.msra.mxu0 0.0
    %1480 = vmatprep.subr.mxu0 0.0
    %1481 = vmatpush1.msra.mxu0 0.0
    %1482 = vmatprep.subr.mxu0 0.0
    %1483 = vmatpush1.msra.mxu0 0.0
    %1484 = vmatprep.subr.mxu0 0.0
    %1485 = vmatpush1.msra.mxu0 0.0
    %1486 = vmatprep.subr.mxu0 0.0
    %1487 = vmatpush1.msra.mxu0 0.0
    %1488 = vmatprep.subr.mxu0 0.0
    %1489 = vmatpush1.msra.mxu0 0.0
    %1490 = vmatprep.subr.mxu0 0.0
    %1491 = vmatpush1.msra.mxu0 0.0
    %1492 = vmatprep.subr.mxu0 0.0
    %1493 = vmatpush1.msra.mxu0 0.0
    %1494 = vmatprep.subr.mxu0 0.0
    %1495 = vmatpush1.msra.mxu0 0.0
    %1496 = vmatprep.subr.mxu0 0.0
    %1497 = vmatpush1.msra.mxu0 0.0
    %1498 = vmatprep.subr.mxu0 0.0
    %1499 = vmatpush1.msra.mxu0 0.0
    %1500 = vmatprep.subr.mxu0 0.0
    %1501 = vmatpush1.msra.mxu0 0.0
    %1502 = vmatprep.subr.mxu0 0.0
    %1503 = vmatpush1.msra.mxu0 0.0
    %1504 = vmatprep.subr.mxu0 0.0
    %1505 = vmatpush1.msra.mxu0 0.0
    %1506 = vmatprep.subr.mxu0 0.0
    %1507 = vmatpush1.msra.mxu0 0.0
    %1508 = vmatprep.subr.mxu0 0.0
    %1509 = vmatpush1.msra.mxu0 0.0
    %1510 = vmatprep.subr.mxu0 0.0
    %1511 = vmatpush1.msra.mxu0 0.0
    %1512 = vmatprep.subr.mxu0 0.0
    %1513 = vmatpush1.msra.mxu0 0.0
    %1514 = vmatprep.subr.mxu0 0.0
    %1515 = vmatpush1.msra.mxu0 0.0
    %1516 = vmatprep.mubr.f32.mxu0 0.0
    %v1517 = vand.u32 %v1085, 4294901760
    %v1518 = vsub.f32 %v1085, %v1517
    %v1519 = vand.u32 %v1518, 4294901760
    %1520 = vmatmul.mubr.f32.gmra.mrb[0].mxu0 %v1519
    %v1521 = vpop.f32.mrb[0].mxu0
    %v1522 = vadd.f32 %v1429, %v1521
    %v1523 = vpop.f32.mrb[0].mxu0
    %1524 = vmatprep.mubr.f32.mxu0 0.0
    %v1525 = vand.u32 %v1088, 4294901760
    %v1526 = vsub.f32 %v1088, %v1525
    %v1527 = vand.u32 %v1526, 4294901760
    %1528 = vmatmul.mubr.f32.gmra.mrb[0].mxu0 %v1527
    %v1529 = vpop.f32.mrb[0].mxu0
    %v1530 = vadd.f32 %v1436, %v1529
    %v1531 = vpop.f32.mrb[0].mxu0
    %1532 = vdwg.mxu0
    %1533 = vmatprep.subr.mxu0 0.0
    %v1534 = vand.u32 %v1068, 4294901760
    %v1535 = vsub.f32 %v1068, %v1534
    %v1536 = vand.u32 %v1535, 4294901760
    %1537 = vmatpush1.msra.mxu0 %v1536
    %1538 = vmatprep.subr.mxu0 0.0
    %v1539 = vand.u32 %v1069, 4294901760
    %v1540 = vsub.f32 %v1069, %v1539
    %v1541 = vand.u32 %v1540, 4294901760
    %1542 = vmatpush1.msra.mxu0 %v1541
    %1543 = vmatprep.subr.mxu0 0.0
    %v1544 = vand.u32 %v1070, 4294901760
    %v1545 = vsub.f32 %v1070, %v1544
    %v1546 = vand.u32 %v1545, 4294901760
    %1547 = vmatpush1.msra.mxu0 %v1546
    %1548 = vmatprep.subr.mxu0 0.0
    %v1549 = vand.u32 %v1071, 4294901760
    %v1550 = vsub.f32 %v1071, %v1549
    %v1551 = vand.u32 %v1550, 4294901760
    %1552 = vmatpush1.msra.mxu0 %v1551
    %1553 = vmatprep.subr.mxu0 0.0
    %v1554 = vand.u32 %v1072, 4294901760
    %v1555 = vsub.f32 %v1072, %v1554
    %v1556 = vand.u32 %v1555, 4294901760
    %1557 = vmatpush1.msra.mxu0 %v1556
    %1558 = vmatprep.subr.mxu0 0.0
    %v1559 = vand.u32 %v1073, 4294901760
    %v1560 = vsub.f32 %v1073, %v1559
    %v1561 = vand.u32 %v1560, 4294901760
    %1562 = vmatpush1.msra.mxu0 %v1561
    %1563 = vmatprep.subr.mxu0 0.0
    %v1564 = vand.u32 %v1074, 4294901760
    %v1565 = vsub.f32 %v1074, %v1564
    %v1566 = vand.u32 %v1565, 4294901760
    %1567 = vmatpush1.msra.mxu0 %v1566
    %1568 = vmatprep.subr.mxu0 0.0
    %v1569 = vand.u32 %v1075, 4294901760
    %v1570 = vsub.f32 %v1075, %v1569
    %v1571 = vand.u32 %v1570, 4294901760
    %1572 = vmatpush1.msra.mxu0 %v1571
    %1573 = vmatprep.subr.mxu0 0.0
    %v1574 = vand.u32 %v1076, 4294901760
    %v1575 = vsub.f32 %v1076, %v1574
    %v1576 = vand.u32 %v1575, 4294901760
    %1577 = vmatpush1.msra.mxu0 %v1576
    %1578 = vmatprep.subr.mxu0 0.0
    %v1579 = vand.u32 %v1077, 4294901760
    %v1580 = vsub.f32 %v1077, %v1579
    %v1581 = vand.u32 %v1580, 4294901760
    %1582 = vmatpush1.msra.mxu0 %v1581
    %1583 = vmatprep.subr.mxu0 0.0
    %v1584 = vand.u32 %v1078, 4294901760
    %v1585 = vsub.f32 %v1078, %v1584
    %v1586 = vand.u32 %v1585, 4294901760
    %1587 = vmatpush1.msra.mxu0 %v1586
    %1588 = vmatprep.subr.mxu0 0.0
    %v1589 = vand.u32 %v1079, 4294901760
    %v1590 = vsub.f32 %v1079, %v1589
    %v1591 = vand.u32 %v1590, 4294901760
    %1592 = vmatpush1.msra.mxu0 %v1591
    %1593 = vmatprep.subr.mxu0 0.0
    %v1594 = vand.u32 %v1092, 4294901760
    %v1595 = vsub.f32 %v1092, %v1594
    %v1596 = vand.u32 %v1595, 4294901760
    %1597 = vmatpush1.msra.mxu0 %v1596
    %1598 = vmatprep.subr.mxu0 0.0
    %1599 = vmatpush1.msra.mxu0 0.0
    %1600 = vmatprep.subr.mxu0 0.0
    %1601 = vmatpush1.msra.mxu0 0.0
    %1602 = vmatprep.subr.mxu0 0.0
    %1603 = vmatpush1.msra.mxu0 0.0
    %1604 = vmatprep.subr.mxu0 0.0
    %1605 = vmatpush1.msra.mxu0 0.0
    %1606 = vmatprep.subr.mxu0 0.0
    %1607 = vmatpush1.msra.mxu0 0.0
    %1608 = vmatprep.subr.mxu0 0.0
    %1609 = vmatpush1.msra.mxu0 0.0
    %1610 = vmatprep.subr.mxu0 0.0
    %1611 = vmatpush1.msra.mxu0 0.0
    %1612 = vmatprep.subr.mxu0 0.0
    %1613 = vmatpush1.msra.mxu0 0.0
    %1614 = vmatprep.subr.mxu0 0.0
    %1615 = vmatpush1.msra.mxu0 0.0
    %1616 = vmatprep.subr.mxu0 0.0
    %1617 = vmatpush1.msra.mxu0 0.0
    %1618 = vmatprep.subr.mxu0 0.0
    %1619 = vmatpush1.msra.mxu0 0.0
    %1620 = vmatprep.subr.mxu0 0.0
    %1621 = vmatpush1.msra.mxu0 0.0
    %1622 = vmatprep.subr.mxu0 0.0
    %1623 = vmatpush1.msra.mxu0 0.0
    %1624 = vmatprep.subr.mxu0 0.0
    %1625 = vmatpush1.msra.mxu0 0.0
    %1626 = vmatprep.subr.mxu0 0.0
    %1627 = vmatpush1.msra.mxu0 0.0
    %1628 = vmatprep.subr.mxu0 0.0
    %1629 = vmatpush1.msra.mxu0 0.0
    %1630 = vmatprep.subr.mxu0 0.0
    %1631 = vmatpush1.msra.mxu0 0.0
    %1632 = vmatprep.subr.mxu0 0.0
    %1633 = vmatpush1.msra.mxu0 0.0
    %1634 = vmatprep.subr.mxu0 0.0
    %1635 = vmatpush1.msra.mxu0 0.0
    %1636 = vmatprep.mubr.f32.mxu0 0.0
    %v1637 = vand.u32 %v1085, 4294901760
    %1638 = vmatmul.mubr.f32.gmra.mrb[0].mxu0 %v1637
    %v1639 = vpop.f32.mrb[0].mxu0
    %v1640 = vadd.f32 %v1522, %v1639
    %v1641 = vpop.f32.mrb[0].mxu0
    %1642 = vmatprep.mubr.f32.mxu0 0.0
    %v1643 = vand.u32 %v1088, 4294901760
    %1644 = vmatmul.mubr.f32.gmra.mrb[0].mxu0 %v1643
    %v1645 = vpop.f32.mrb[0].mxu0
    %v1646 = vadd.f32 %v1530, %v1645
    %v1647 = vpop.f32.mrb[0].mxu0
    %1648 = vdwg.mxu0
    %1649 = vmatprep.subr.mxu0 0.0
    %v1650 = vand.u32 %v1068, 4294901760
    %1651 = vmatpush1.msra.mxu0 %v1650
    %1652 = vmatprep.subr.mxu0 0.0
    %v1653 = vand.u32 %v1069, 4294901760
    %1654 = vmatpush1.msra.mxu0 %v1653
    %1655 = vmatprep.subr.mxu0 0.0
    %v1656 = vand.u32 %v1070, 4294901760
    %1657 = vmatpush1.msra.mxu0 %v1656
    %1658 = vmatprep.subr.mxu0 0.0
    %v1659 = vand.u32 %v1071, 4294901760
    %1660 = vmatpush1.msra.mxu0 %v1659
    %1661 = vmatprep.subr.mxu0 0.0
    %v1662 = vand.u32 %v1072, 4294901760
    %1663 = vmatpush1.msra.mxu0 %v1662
    %1664 = vmatprep.subr.mxu0 0.0
    %v1665 = vand.u32 %v1073, 4294901760
    %1666 = vmatpush1.msra.mxu0 %v1665
    %1667 = vmatprep.subr.mxu0 0.0
    %v1668 = vand.u32 %v1074, 4294901760
    %1669 = vmatpush1.msra.mxu0 %v1668
    %1670 = vmatprep.subr.mxu0 0.0
    %v1671 = vand.u32 %v1075, 4294901760
    %1672 = vmatpush1.msra.mxu0 %v1671
    %1673 = vmatprep.subr.mxu0 0.0
    %v1674 = vand.u32 %v1076, 4294901760
    %1675 = vmatpush1.msra.mxu0 %v1674
    %1676 = vmatprep.subr.mxu0 0.0
    %v1677 = vand.u32 %v1077, 4294901760
    %1678 = vmatpush1.msra.mxu0 %v1677
    %1679 = vmatprep.subr.mxu0 0.0
    %v1680 = vand.u32 %v1078, 4294901760
    %1681 = vmatpush1.msra.mxu0 %v1680
    %1682 = vmatprep.subr.mxu0 0.0
    %v1683 = vand.u32 %v1079, 4294901760
    %1684 = vmatpush1.msra.mxu0 %v1683
    %1685 = vmatprep.subr.mxu0 0.0
    %v1686 = vand.u32 %v1092, 4294901760
    %1687 = vmatpush1.msra.mxu0 %v1686
    %1688 = vmatprep.subr.mxu0 0.0
    %1689 = vmatpush1.msra.mxu0 0.0
    %1690 = vmatprep.subr.mxu0 0.0
    %1691 = vmatpush1.msra.mxu0 0.0
    %1692 = vmatprep.subr.mxu0 0.0
    %1693 = vmatpush1.msra.mxu0 0.0
    %1694 = vmatprep.subr.mxu0 0.0
    %1695 = vmatpush1.msra.mxu0 0.0
    %1696 = vmatprep.subr.mxu0 0.0
    %1697 = vmatpush1.msra.mxu0 0.0
    %1698 = vmatprep.subr.mxu0 0.0
    %1699 = vmatpush1.msra.mxu0 0.0
    %1700 = vmatprep.subr.mxu0 0.0
    %1701 = vmatpush1.msra.mxu0 0.0
    %1702 = vmatprep.subr.mxu0 0.0
    %1703 = vmatpush1.msra.mxu0 0.0
    %1704 = vmatprep.subr.mxu0 0.0
    %1705 = vmatpush1.msra.mxu0 0.0
    %1706 = vmatprep.subr.mxu0 0.0
    %1707 = vmatpush1.msra.mxu0 0.0
    %1708 = vmatprep.subr.mxu0 0.0
    %1709 = vmatpush1.msra.mxu0 0.0
    %1710 = vmatprep.subr.mxu0 0.0
    %1711 = vmatpush1.msra.mxu0 0.0
    %1712 = vmatprep.subr.mxu0 0.0
    %1713 = vmatpush1.msra.mxu0 0.0
    %1714 = vmatprep.subr.mxu0 0.0
    %1715 = vmatpush1.msra.mxu0 0.0
    %1716 = vmatprep.subr.mxu0 0.0
    %1717 = vmatpush1.msra.mxu0 0.0
    %1718 = vmatprep.subr.mxu0 0.0
    %1719 = vmatpush1.msra.mxu0 0.0
    %1720 = vmatprep.subr.mxu0 0.0
    %1721 = vmatpush1.msra.mxu0 0.0
    %1722 = vmatprep.subr.mxu0 0.0
    %1723 = vmatpush1.msra.mxu0 0.0
    %1724 = vmatprep.subr.mxu0 0.0
    %1725 = vmatpush1.msra.mxu0 0.0
    %1726 = vmatprep.mubr.f32.mxu0 0.0
    %v1727 = vand.u32 %v1085, 4294901760
    %1728 = vmatmul.mubr.f32.gmra.mrb[0].mxu0 %v1727
    %v1729 = vpop.f32.mrb[0].mxu0
    %v1730 = vadd.f32 %v1640, %v1729
    %v1731 = vpop.f32.mrb[0].mxu0
    %1732 = vmatprep.mubr.f32.mxu0 0.0
    %v1733 = vand.u32 %v1088, 4294901760
    %1734 = vmatmul.mubr.f32.gmra.mrb[0].mxu0 %v1733
    %v1735 = vpop.f32.mrb[0].mxu0
    %v1736 = vadd.f32 %v1646, %v1735
    %v1737 = vpop.f32.mrb[0].mxu0
    %1738 = vdwg.mxu0
    %v1739 = vld [vmem:[%s2] sm:$0xff]
    %v1740 = vld [vmem:[%s2 + $0x8] sm:$0x3]
    %v1741 = vsub.f32 %v1730, %v1739
    %v1742 = vsub.f32 %v1736, %v1740
    %v1743 = vmul.f32 %v1741, %v1741
    %v1744 = vmul.f32 %v1742, %v1742
    %v1745 = vsel %vm76, %v1744, 0.0
    %v1746 = vadd.f32 %v1743, %v1745
    %v1747 = vrot.slane %v1746, 4
    %v1748 = vadd.f32 %v1746, %v1747
    %v1749 = vrot.slane %v1748, 2
    %v1750 = vadd.f32 %v1748, %v1749
    %v1751 = vrot.slane %v1750, 1
    %v1752 = vadd.f32 %v1750, %v1751
    %1753 = vst [vmem:[#allocation2] sm:$0x1] %v1752
    // Predicated region
    $region22: #{quad_losses.1} parent=1 // pred_check
      _
    $region23: #{quad_losses.1} parent=1 // pred_check_branch
      %1755 = sbr.rel (0) target = $region25
    $region24: #{quad_losses.1} parent=1 // pred_region
      %s1757 = ssub.s32 16, 16
      %1758 = vsyncadd [#allocation3], %s1757
      %s1760 = sshll.u32 [#allocation2], 4
      %s1761 = int_to_ptr.vmem [resolvable:$true] %s1760
      %1763 = dma.vmem_to_hbm [thread:$0]  %s1761, 16, %s5, [#allocation3]
    $region25: #{quad_losses.1} parent=1 // pred_fallthru
      _
    // Predicated region
    $region26: #{quad_losses.1} parent=1 // pred_check
      _
    $region27: #{quad_losses.1} parent=1 // pred_check_branch
      %1765 = sbr.rel (0) target = $region29
    $region28: #{quad_losses.1} parent=1 // pred_region
      %1766 = dma.done [#allocation3], 16
    $region29: #{quad_losses.1} parent=1 // pred_fallthru
      _
    %1767 = vsyncpa [#allocation3], 1

</llo_original>
